<compile_context>
chip_gen: v5e
topology: v5e:2x2
jax: 0.10.0
libtpu: 0.0.40
codegen_flags: <defaults>
</compile_context>

<pallas_src>
import functools

import jax
import jax.numpy as jnp
from jax.experimental import pallas as pl
from jax.experimental.pallas import tpu as pltpu

LANE = 128  # lane width: channel / feature axes are padded to this


def conv1d_output_size(size, kernel_size=1, stride=1, pad=0, dilation=1):
    return (size + 2 * pad - dilation * (kernel_size - 1) - 1) // stride + 1


# ----------------------------- Fused Pallas kernel ---------------------------

def _siamese_fused_kernel(x_ref, wc1, wc2, wc3, wl1, wl2, wl3, wl4, aux,
                          o_ref, act_a, act_b, *, seq_lens, kernels, strides, b_tile):
    """One batch TILE (b_tile samples) per grid step.  Everything stays in VMEM.

    Activation layout ("batch-minor"): row = position * b_tile + b, 128 lanes = channels.
      x_ref  : (L0*b_tile, 128) bf16   input tile
      wc*    : (K, 128, 128)    bf16   conv weights, wc[k][cin, cout] (zero-padded)
      wl1    : (L3, 128, 128)   bf16   lin1 weights with torch flatten order folded in
      wl2-4  : (128, 128)       bf16   linear weights, transposed + zero-padded
      aux    : (16, 128)        f32    rows 0-8: conv{1,2,3} (bias, bn_scale, bn_shift);
                                       rows 9-12: lin{1,2,3,4} biases; rows 13-15 zero pad
      o_ref  : (b_tile, 128)    f32    padded output rows for this tile
      act_a  : (L1*b_tile, 128) bf16   scratch (holds conv1 and conv3 outputs)
      act_b  : (L2*b_tile, 128) bf16   scratch (holds conv2 output)
    Invariant: padded weight rows/cols and padded aux lanes are ZERO, so padded lanes of
    every activation are exactly zero and never leak into downstream contractions.
    """
    L0, L1, L2, L3 = seq_lens
    B = b_tile
    f32 = jnp.float32

    def conv_relu_bn(src, dst, L_out, K, stride, w_ref, aux_row):
        bias = aux[pl.ds(aux_row, 1), :]
        scale = aux[pl.ds(aux_row + 1, 1), :]
        shift = aux[pl.ds(aux_row + 2, 1), :]

        def finish(z, start, nrows):
            a = jnp.maximum(z + bias, 0.0) * scale + shift      # f32 elementwise
            dst[pl.ds(start, nrows), :] = a.astype(jnp.bfloat16)

        if stride == 1:
            # K accumulated matmuls with M = L_out*B; tap shift k is a flat row offset
            # of k*B in batch-minor layout (always a multiple of 8 -> aligned reads).
            rows = L_out * B
            z = jnp.dot(src[pl.ds(0, rows), :], w_ref[0], preferred_element_type=f32)
            for k in range(1, K):
                z = z + jnp.dot(src[pl.ds(k * B, rows), :], w_ref[k],
                                preferred_element_type=f32)
            finish(z, 0, rows)
        else:
            # TODO(synk): stride>1 falls back to one (B,128)@(128,128) matmul chain per
            # output position (correct, just less MXU-efficient; unused by this config).
            for l in range(L_out):
                z = jnp.dot(src[pl.ds(l * stride * B, B), :], w_ref[0],
                            preferred_element_type=f32)
                for k in range(1, K):
                    z = z + jnp.dot(src[pl.ds((l * stride + k) * B, B), :], w_ref[k],
                                    preferred_element_type=f32)
                finish(z, l * B, B)

    # conv stack: x -> act_a -> act_b -> act_a  (downstream reads only valid rows)
    conv_relu_bn(x_ref, act_a, L1, kernels[0], strides[0], wc1, 0)
    conv_relu_bn(act_a, act_b, L2, kernels[1], strides[1], wc2, 3)
    conv_relu_bn(act_b, act_a, L3, kernels[2], strides[2], wc3, 6)

    # lin1: torch channel-major flatten folded into wl1; L3 accumulated matmuls with
    # M = B over contiguous 8-aligned position slices of conv3's output.
    h = jnp.dot(act_a[pl.ds(0, B), :], wl1[0], preferred_element_type=f32)
    for l in range(1, L3):
        h = h + jnp.dot(act_a[pl.ds(l * B, B), :], wl1[l], preferred_element_type=f32)
    h = jnp.maximum(h + aux[pl.ds(9, 1), :], 0.0).astype(jnp.bfloat16)
    # TODO(synk): Dropout is inference-mode identity here (p only matters in training).
    h = jnp.maximum(jnp.dot(h, wl2[...], preferred_element_type=f32)
                    + aux[pl.ds(10, 1), :], 0.0).astype(jnp.bfloat16)
    h = jnp.maximum(jnp.dot(h, wl3[...], preferred_element_type=f32)
                    + aux[pl.ds(11, 1), :], 0.0).astype(jnp.bfloat16)
    o_ref[...] = (jnp.dot(h, wl4[...], preferred_element_type=f32)
                  + aux[pl.ds(12, 1), :])


# --------------------------- Parameter packing (once) ------------------------

def pack_params(params, input_seq_len, eps=1e-5):
    """Transpose/pad weights, cast to bf16, fold BN + flatten order -- done ONCE."""
    c1, c2, c3, l1, l2, l3, l4 = params

    def pad_vec(v):
        return jnp.pad(v.astype(jnp.float32), (0, LANE - v.shape[0]))

    def pack_conv(cp):
        W, b, gamma, beta, rm, rv, stride = cp
        cout, cin, k = W.shape
        w = jnp.zeros((k, LANE, LANE), jnp.float32)
        w = w.at[:, :cin, :cout].set(jnp.transpose(W, (2, 1, 0)))  # (K, Cin, Cout)
        scale = gamma / jnp.sqrt(rv + eps)          # eval-mode BN folded to affine
        shift = beta - rm * scale
        return w.astype(jnp.bfloat16), [pad_vec(b), pad_vec(scale), pad_vec(shift)], k, stride

    wc1, aux1, k1, st1 = pack_conv(c1)
    wc2, aux2, k2, st2 = pack_conv(c2)
    wc3, aux3, k3, st3 = pack_conv(c3)

    L0 = input_seq_len
    L1 = conv1d_output_size(L0, k1, st1)
    L2 = conv1d_output_size(L1, k2, st2)
    L3 = conv1d_output_size(L2, k3, st3)
    c3_out = c3[0].shape[0]

    # lin1: fold PyTorch channel-major flatten (idx = c*L3 + l) into the weight.
    W1, b1 = l1
    F1 = W1.shape[0]
    w1_lcf = jnp.transpose(W1.reshape(F1, c3_out, L3), (2, 1, 0))   # (L3, C3, F1)
    wl1 = jnp.zeros((L3, LANE, LANE), jnp.float32)
    wl1 = wl1.at[:, :c3_out, :F1].set(w1_lcf)
    wl1 = wl1.astype(jnp.bfloat16)

    def pack_lin(lp):
        W, b = lp
        fout, fin = W.shape
        w = jnp.zeros((LANE, LANE), jnp.float32).at[:fin, :fout].set(W.T)
        return w.astype(jnp.bfloat16), pad_vec(b)

    wl2, b2p = pack_lin(l2)
    wl3, b3p = pack_lin(l3)
    wl4, b4p = pack_lin(l4)

    aux = jnp.stack(aux1 + aux2 + aux3 + [pad_vec(b1), b2p, b3p, b4p])   # (13,128)
    aux = jnp.concatenate([aux, jnp.zeros((3, LANE), jnp.float32)], axis=0)  # pad to 16 rows

    packed = (wc1, wc2, wc3, wl1, wl2, wl3, wl4, aux)
    meta = dict(seq_lens=(L0, L1, L2, L3), kernels=(k1, k2, k3),
                strides=(st1, st2, st3), mapping_dim=l4[0].shape[0])
    return packed, meta


# ------------------------------- Forward wrapper ------------------------------

def siamese_forward(x, packed, meta, b_tile=8):
    wc1, wc2, wc3, wl1, wl2, wl3, wl4, aux = packed
    L0, L1, L2, L3 = meta["seq_lens"]
    K1, K2, K3 = meta["kernels"]
    N, C_in, _ = x.shape
    assert b_tile % 8 == 0, "b_tile must be a multiple of 8 (sublane alignment)"
    G = -(-N // b_tile)
    Np = G * b_tile

    # One-time per-call input prep: NCL -> per-tile batch-minor (L0*b_tile, 128) bf16.
    # TODO(synk): input channels are padded to 128 lanes in HBM (simple/robust); a
    # compact (.., C_in)-last layout expanded in-kernel would cut v5e HBM read traffic.
    xt = jnp.transpose(x, (0, 2, 1)).astype(jnp.bfloat16)                # (N, L0, C)
    xp = jnp.zeros((Np, L0, LANE), jnp.bfloat16).at[:N, :, :C_in].set(xt)
    xp = xp.reshape(G, b_tile, L0, LANE).transpose(0, 2, 1, 3).reshape(G, L0 * b_tile, LANE)

    kernel = functools.partial(
        _siamese_fused_kernel,
        seq_lens=(L0, L1, L2, L3),
        kernels=meta["kernels"],
        strides=meta["strides"],
        b_tile=b_tile)

    out = pl.pallas_call(
        kernel,
        out_shape=jax.ShapeDtypeStruct((G, b_tile, LANE), jnp.float32),
        grid_spec=pltpu.PrefetchScalarGridSpec(
            num_scalar_prefetch=0,
            grid=(G,),
            in_specs=[
                pl.BlockSpec((None, L0 * b_tile, LANE), lambda g: (g, 0, 0)),  # x tile
                pl.BlockSpec((K1, LANE, LANE), lambda g: (0, 0, 0)),           # wc1
                pl.BlockSpec((K2, LANE, LANE), lambda g: (0, 0, 0)),           # wc2
                pl.BlockSpec((K3, LANE, LANE), lambda g: (0, 0, 0)),           # wc3
                pl.BlockSpec((L3, LANE, LANE), lambda g: (0, 0, 0)),           # wl1
                pl.BlockSpec((LANE, LANE), lambda g: (0, 0)),                  # wl2
                pl.BlockSpec((LANE, LANE), lambda g: (0, 0)),                  # wl3
                pl.BlockSpec((LANE, LANE), lambda g: (0, 0)),                  # wl4
                pl.BlockSpec((aux.shape[0], LANE), lambda g: (0, 0)),          # aux
            ],
            out_specs=pl.BlockSpec((None, b_tile, LANE), lambda g: (g, 0, 0)),
            scratch_shapes=[pltpu.VMEM((L1 * b_tile, LANE), jnp.bfloat16),
                            pltpu.VMEM((L2 * b_tile, LANE), jnp.bfloat16)],
        ),
        compiler_params=pltpu.CompilerParams(
            dimension_semantics=("parallel",),
            vmem_limit_bytes=32 * 1024 * 1024),
    )(xp, wc1, wc2, wc3, wl1, wl2, wl3, wl4, aux)

    return out.reshape(Np, LANE)[:N, :meta["mapping_dim"]]


# ------------------------------- Parameters -----------------------------------

def make_params(key, input_channels, input_seq_len, config):
    (ch1, ch2, ch3, k1, k2, k3, st1, st2, st3,
     lf1, lf2, lf3, mapping_dim, _dropout) = config
    keys = iter(jax.random.split(key, 32))

    def conv_params(cin, cout, k, stride):
        W = 0.1 * jax.random.normal(next(keys), (cout, cin, k), jnp.float32)
        b = 0.1 * jax.random.normal(next(keys), (cout,), jnp.float32)
        gamma = 1.0 + 0.05 * jax.random.normal(next(keys), (cout,), jnp.float32)
        beta = 0.05 * jax.random.normal(next(keys), (cout,), jnp.float32)
        rm = 0.05 * jax.random.normal(next(keys), (cout,), jnp.float32)
        rv = 1.0 + 0.05 * jax.random.uniform(next(keys), (cout,), jnp.float32)
        return (W, b, gamma, beta, rm, rv, stride)

    def lin_params(fin, fout):
        W = 0.1 * jax.random.normal(next(keys), (fout, fin), jnp.float32)
        b = 0.1 * jax.random.normal(next(keys), (fout,), jnp.float32)
        return (W, b)

    c1 = conv_params(input_channels, ch1, k1, st1)
    c2 = conv_params(ch1, ch2, k2, st2)
    c3 = conv_params(ch2, ch3, k3, st3)
    f = conv1d_output_size
    feats = f(f(f(input_seq_len, k1, st1), k2, st2), k3, st3)
    l1 = lin_params(ch3 * feats, lf1)
    l2 = lin_params(lf1, lf2)
    l3 = lin_params(lf2, lf3)
    l4 = lin_params(lf3, mapping_dim)
    return (c1, c2, c3, l1, l2, l3, l4)


# ------------------------------- Reference ------------------------------------

def reference_forward(x, params, matmul_dtype=jnp.float32, eps=1e-5):
    """Pure-JAX reference.  matmul_dtype=bfloat16 mirrors the kernel's mixed precision
    (bf16 matmul operands, f32 accumulation, f32 elementwise) for a tight comparison."""
    c1, c2, c3, l1, l2, l3, l4 = params
    md = matmul_dtype

    def conv_block(h, W, b, gamma, beta, rm, rv, stride):
        y = jax.lax.conv_general_dilated(
            h.astype(md), W.astype(md), window_strides=(stride,), padding="VALID",
            dimension_numbers=("NCH", "OIH", "NCH"),
            preferred_element_type=jnp.float32)
        y = y + b[None, :, None]
        y = jnp.maximum(y, 0.0)
        return gamma[None, :, None] * (y - rm[None, :, None]) / \
            jnp.sqrt(rv[None, :, None] + eps) + beta[None, :, None]

    h = conv_block(x, *c1)
    h = conv_block(h, *c2)
    h = conv_block(h, *c3)
    h = h.reshape(h.shape[0], -1)                      # torch.flatten(x, 1)

    def lin(h, W, b, relu=True):
        y = jnp.dot(h.astype(md), W.T.astype(md),
                    preferred_element_type=jnp.float32) + b
        return jnp.maximum(y, 0.0) if relu else y

    h = lin(h, *l1)
    h = lin(h, *l2)
    h = lin(h, *l3)
    return lin(h, *l4, relu=False)


# --------------------------------- Main ---------------------------------------

if __name__ == "__main__":
    # config = (ch1, ch2, ch3, k1, k2, k3, s1, s2, s3, lf1, lf2, lf3, mapping_dim, dropout)
    config = (8, 8, 8, 3, 3, 3, 1, 1, 1, 32, 32, 16, 8, 0.1)
    input_channels, input_seq_len = 4, 16
    batch, b_tile = 16, 8          # grid = 2 -> both v7x TensorCores busy

    key = jax.random.PRNGKey(0)
    k_x, k_p = jax.random.split(key)

    params = make_params(k_p, input_channels, input_seq_len, config)
    packed, meta = pack_params(params, input_seq_len)   # one-time weight prep

    x = jax.random.normal(k_x, (batch, input_channels, input_seq_len), jnp.float32)

    fwd = jax.jit(lambda x_, p_: siamese_forward(x_, p_, meta, b_tile=b_tile))
    out = jax.block_until_ready(fwd(x, packed))

    # Tight check against a reference that mirrors the kernel's bf16 matmul precision.
    ref = reference_forward(x, params, matmul_dtype=jnp.bfloat16)
    assert out.shape == (batch, config[12]), out.shape
    err = float(jnp.max(jnp.abs(out - ref)))
    scale = float(jnp.max(jnp.abs(ref))) + 1e-6
    assert err <= 1e-2 + 1e-2 * scale, (err, scale)
    # Loose sanity check against the pure-f32 reference.
    ref32 = reference_forward(x, params)
    assert float(jnp.max(jnp.abs(out - ref32))) <= 0.1, \
        float(jnp.max(jnp.abs(out - ref32)))

    print("KERNEL_OK")
</pallas_src>

<mosaic_0001>
module attributes {stable_mosaic.version = 11 : i64} {
  func.func @_siamese_fused_kernel(%arg0: i32, %arg1: memref<1x128x128xbf16, #tpu.memory_space<vmem>>, %arg2: memref<3x128x128xbf16, #tpu.memory_space<vmem>>, %arg3: memref<3x128x128xbf16, #tpu.memory_space<vmem>>, %arg4: memref<3x128x128xbf16, #tpu.memory_space<vmem>>, %arg5: memref<10x128x128xbf16, #tpu.memory_space<vmem>>, %arg6: memref<128x128xbf16, #tpu.memory_space<vmem>>, %arg7: memref<128x128xbf16, #tpu.memory_space<vmem>>, %arg8: memref<128x128xbf16, #tpu.memory_space<vmem>>, %arg9: memref<16x128xf32, #tpu.memory_space<vmem>>, %arg10: memref<1x8x128xf32, #tpu.memory_space<vmem>>, %arg11: memref<112x128xbf16, #tpu.memory_space<vmem>>, %arg12: memref<96x128xbf16, #tpu.memory_space<vmem>>) attributes {dimension_semantics = [#tpu.dimension_semantics<parallel>], iteration_bounds = array<i64: 2>, scalar_prefetch = 0 : i64, scratch_operands = 2 : i64, tpu.core_type = #tpu.core_type<tc>, window_params = [{transform_indices = @transform_0, window_bounds = array<i64: 1, 128, 128>}, {pipeline_mode = #tpu.pipeline_mode<synchronous>, transform_indices = @transform_1, window_bounds = array<i64: 3, 128, 128>}, {pipeline_mode = #tpu.pipeline_mode<synchronous>, transform_indices = @transform_2, window_bounds = array<i64: 3, 128, 128>}, {pipeline_mode = #tpu.pipeline_mode<synchronous>, transform_indices = @transform_3, window_bounds = array<i64: 3, 128, 128>}, {pipeline_mode = #tpu.pipeline_mode<synchronous>, transform_indices = @transform_4, window_bounds = array<i64: 10, 128, 128>}, {pipeline_mode = #tpu.pipeline_mode<synchronous>, transform_indices = @transform_5, window_bounds = array<i64: 128, 128>}, {pipeline_mode = #tpu.pipeline_mode<synchronous>, transform_indices = @transform_6, window_bounds = array<i64: 128, 128>}, {pipeline_mode = #tpu.pipeline_mode<synchronous>, transform_indices = @transform_7, window_bounds = array<i64: 128, 128>}, {pipeline_mode = #tpu.pipeline_mode<synchronous>, transform_indices = @transform_8, window_bounds = array<i64: 16, 128>}, {transform_indices = @transform_9, window_bounds = array<i64: 1, 8, 128>}]} {
    %c0 = arith.constant 0 : index
    %c0_0 = arith.constant 0 : index
    %0 = vector.load %arg9[%c0, %c0_0] : memref<16x128xf32, #tpu.memory_space<vmem>>, vector<1x128xf32>
    %c1 = arith.constant 1 : index
    %c0_1 = arith.constant 0 : index
    %1 = vector.load %arg9[%c1, %c0_1] : memref<16x128xf32, #tpu.memory_space<vmem>>, vector<1x128xf32>
    %c2 = arith.constant 2 : index
    %c0_2 = arith.constant 0 : index
    %2 = vector.load %arg9[%c2, %c0_2] : memref<16x128xf32, #tpu.memory_space<vmem>>, vector<1x128xf32>
    %c0_3 = arith.constant 0 : index
    %c0_4 = arith.constant 0 : index
    %c0_5 = arith.constant 0 : index
    %3 = vector.load %arg1[%c0_3, %c0_4, %c0_5] : memref<1x128x128xbf16, #tpu.memory_space<vmem>>, vector<1x112x128xbf16>
    %4 = vector.shape_cast %3 : vector<1x112x128xbf16> to vector<112x128xbf16>
    %c0_6 = arith.constant 0 : index
    %c0_7 = arith.constant 0 : index
    %c0_8 = arith.constant 0 : index
    %5 = vector.load %arg2[%c0_6, %c0_7, %c0_8] : memref<3x128x128xbf16, #tpu.memory_space<vmem>>, vector<1x128x128xbf16>
    %6 = vector.shape_cast %5 : vector<1x128x128xbf16> to vector<128x128xbf16>
    %cst = arith.constant dense<0.000000e+00> : vector<112x128xf32>
    %7 = tpu.matmul %4, %6, %cst {dimension_numbers = #tpu.dot_dimension_numbers<[1], [0], [0], [1], [0, 0, 1, 1], [], []>} : vector<112x128xbf16>, vector<128x128xbf16>, vector<112x128xf32> -> vector<112x128xf32>
    %c0_9 = arith.constant 0 : index
    %c8 = arith.constant 8 : index
    %c0_10 = arith.constant 0 : index
    %8 = vector.load %arg1[%c0_9, %c8, %c0_10] : memref<1x128x128xbf16, #tpu.memory_space<vmem>>, vector<1x112x128xbf16>
    %9 = vector.shape_cast %8 : vector<1x112x128xbf16> to vector<112x128xbf16>
    %c1_11 = arith.constant 1 : index
    %c0_12 = arith.constant 0 : index
    %c0_13 = arith.constant 0 : index
    %10 = vector.load %arg2[%c1_11, %c0_12, %c0_13] : memref<3x128x128xbf16, #tpu.memory_space<vmem>>, vector<1x128x128xbf16>
    %11 = vector.shape_cast %10 : vector<1x128x128xbf16> to vector<128x128xbf16>
    %cst_14 = arith.constant dense<0.000000e+00> : vector<112x128xf32>
    %12 = tpu.matmul %9, %11, %cst_14 {dimension_numbers = #tpu.dot_dimension_numbers<[1], [0], [0], [1], [0, 0, 1, 1], [], []>} : vector<112x128xbf16>, vector<128x128xbf16>, vector<112x128xf32> -> vector<112x128xf32>
    %13 = arith.addf %7, %12 : vector<112x128xf32>
    %c0_15 = arith.constant 0 : index
    %c16 = arith.constant 16 : index
    %c0_16 = arith.constant 0 : index
    %14 = vector.load %arg1[%c0_15, %c16, %c0_16] : memref<1x128x128xbf16, #tpu.memory_space<vmem>>, vector<1x112x128xbf16>
    %15 = vector.shape_cast %14 : vector<1x112x128xbf16> to vector<112x128xbf16>
    %c2_17 = arith.constant 2 : index
    %c0_18 = arith.constant 0 : index
    %c0_19 = arith.constant 0 : index
    %16 = vector.load %arg2[%c2_17, %c0_18, %c0_19] : memref<3x128x128xbf16, #tpu.memory_space<vmem>>, vector<1x128x128xbf16>
    %17 = vector.shape_cast %16 : vector<1x128x128xbf16> to vector<128x128xbf16>
    %cst_20 = arith.constant dense<0.000000e+00> : vector<112x128xf32>
    %18 = tpu.matmul %15, %17, %cst_20 {dimension_numbers = #tpu.dot_dimension_numbers<[1], [0], [0], [1], [0, 0, 1, 1], [], []>} : vector<112x128xbf16>, vector<128x128xbf16>, vector<112x128xf32> -> vector<112x128xf32>
    %19 = arith.addf %13, %18 : vector<112x128xf32>
    %20 = vector.broadcast %0 : vector<1x128xf32> to vector<112x128xf32>
    %21 = arith.addf %19, %20 : vector<112x128xf32>
    %cst_21 = arith.constant 0.000000e+00 : f32
    %22 = vector.broadcast %cst_21 : f32 to vector<112x128xf32>
    %23 = arith.maximumf %21, %22 : vector<112x128xf32>
    %24 = vector.broadcast %1 : vector<1x128xf32> to vector<112x128xf32>
    %25 = arith.mulf %23, %24 : vector<112x128xf32>
    %26 = vector.broadcast %2 : vector<1x128xf32> to vector<112x128xf32>
    %27 = arith.addf %25, %26 : vector<112x128xf32>
    %28 = arith.truncf %27 : vector<112x128xf32> to vector<112x128xbf16>
    %c0_22 = arith.constant 0 : index
    %c0_23 = arith.constant 0 : index
    %29 = vector.load %arg11[%c0_22, %c0_23] : memref<112x128xbf16, #tpu.memory_space<vmem>>, vector<112x128xbf16>
    tpu.vector_store %arg11[%c0_22, %c0_23], %28 {strides = array<i32>} : memref<112x128xbf16, #tpu.memory_space<vmem>>, vector<112x128xbf16>,
    %c3 = arith.constant 3 : index
    %c0_24 = arith.constant 0 : index
    %30 = vector.load %arg9[%c3, %c0_24] : memref<16x128xf32, #tpu.memory_space<vmem>>, vector<1x128xf32>
    %c4 = arith.constant 4 : index
    %c0_25 = arith.constant 0 : index
    %31 = vector.load %arg9[%c4, %c0_25] : memref<16x128xf32, #tpu.memory_space<vmem>>, vector<1x128xf32>
    %c5 = arith.constant 5 : index
    %c0_26 = arith.constant 0 : index
    %32 = vector.load %arg9[%c5, %c0_26] : memref<16x128xf32, #tpu.memory_space<vmem>>, vector<1x128xf32>
    %c0_27 = arith.constant 0 : index
    %c0_28 = arith.constant 0 : index
    %33 = vector.load %arg11[%c0_27, %c0_28] : memref<112x128xbf16, #tpu.memory_space<vmem>>, vector<96x128xbf16>
    %c0_29 = arith.constant 0 : index
    %c0_30 = arith.constant 0 : index
    %c0_31 = arith.constant 0 : index
    %34 = vector.load %arg3[%c0_29, %c0_30, %c0_31] : memref<3x128x128xbf16, #tpu.memory_space<vmem>>, vector<1x128x128xbf16>
    %35 = vector.shape_cast %34 : vector<1x128x128xbf16> to vector<128x128xbf16>
    %cst_32 = arith.constant dense<0.000000e+00> : vector<96x128xf32>
    %36 = tpu.matmul %33, %35, %cst_32 {dimension_numbers = #tpu.dot_dimension_numbers<[1], [0], [0], [1], [0, 0, 1, 1], [], []>} : vector<96x128xbf16>, vector<128x128xbf16>, vector<96x128xf32> -> vector<96x128xf32>
    %c8_33 = arith.constant 8 : index
    %c0_34 = arith.constant 0 : index
    %37 = vector.load %arg11[%c8_33, %c0_34] : memref<112x128xbf16, #tpu.memory_space<vmem>>, vector<96x128xbf16>
    %c1_35 = arith.constant 1 : index
    %c0_36 = arith.constant 0 : index
    %c0_37 = arith.constant 0 : index
    %38 = vector.load %arg3[%c1_35, %c0_36, %c0_37] : memref<3x128x128xbf16, #tpu.memory_space<vmem>>, vector<1x128x128xbf16>
    %39 = vector.shape_cast %38 : vector<1x128x128xbf16> to vector<128x128xbf16>
    %cst_38 = arith.constant dense<0.000000e+00> : vector<96x128xf32>
    %40 = tpu.matmul %37, %39, %cst_38 {dimension_numbers = #tpu.dot_dimension_numbers<[1], [0], [0], [1], [0, 0, 1, 1], [], []>} : vector<96x128xbf16>, vector<128x128xbf16>, vector<96x128xf32> -> vector<96x128xf32>
    %41 = arith.addf %36, %40 : vector<96x128xf32>
    %c16_39 = arith.constant 16 : index
    %c0_40 = arith.constant 0 : index
    %42 = vector.load %arg11[%c16_39, %c0_40] : memref<112x128xbf16, #tpu.memory_space<vmem>>, vector<96x128xbf16>
    %c2_41 = arith.constant 2 : index
    %c0_42 = arith.constant 0 : index
    %c0_43 = arith.constant 0 : index
    %43 = vector.load %arg3[%c2_41, %c0_42, %c0_43] : memref<3x128x128xbf16, #tpu.memory_space<vmem>>, vector<1x128x128xbf16>
    %44 = vector.shape_cast %43 : vector<1x128x128xbf16> to vector<128x128xbf16>
    %cst_44 = arith.constant dense<0.000000e+00> : vector<96x128xf32>
    %45 = tpu.matmul %42, %44, %cst_44 {dimension_numbers = #tpu.dot_dimension_numbers<[1], [0], [0], [1], [0, 0, 1, 1], [], []>} : vector<96x128xbf16>, vector<128x128xbf16>, vector<96x128xf32> -> vector<96x128xf32>
    %46 = arith.addf %41, %45 : vector<96x128xf32>
    %47 = vector.broadcast %30 : vector<1x128xf32> to vector<96x128xf32>
    %48 = arith.addf %46, %47 : vector<96x128xf32>
    %cst_45 = arith.constant 0.000000e+00 : f32
    %49 = vector.broadcast %cst_45 : f32 to vector<96x128xf32>
    %50 = arith.maximumf %48, %49 : vector<96x128xf32>
    %51 = vector.broadcast %31 : vector<1x128xf32> to vector<96x128xf32>
    %52 = arith.mulf %50, %51 : vector<96x128xf32>
    %53 = vector.broadcast %32 : vector<1x128xf32> to vector<96x128xf32>
    %54 = arith.addf %52, %53 : vector<96x128xf32>
    %55 = arith.truncf %54 : vector<96x128xf32> to vector<96x128xbf16>
    %c0_46 = arith.constant 0 : index
    %c0_47 = arith.constant 0 : index
    %56 = vector.load %arg12[%c0_46, %c0_47] : memref<96x128xbf16, #tpu.memory_space<vmem>>, vector<96x128xbf16>
    tpu.vector_store %arg12[%c0_46, %c0_47], %55 {strides = array<i32>} : memref<96x128xbf16, #tpu.memory_space<vmem>>, vector<96x128xbf16>,
    %c6 = arith.constant 6 : index
    %c0_48 = arith.constant 0 : index
    %57 = vector.load %arg9[%c6, %c0_48] : memref<16x128xf32, #tpu.memory_space<vmem>>, vector<1x128xf32>
    %c7 = arith.constant 7 : index
    %c0_49 = arith.constant 0 : index
    %58 = vector.load %arg9[%c7, %c0_49] : memref<16x128xf32, #tpu.memory_space<vmem>>, vector<1x128xf32>
    %c8_50 = arith.constant 8 : index
    %c0_51 = arith.constant 0 : index
    %59 = vector.load %arg9[%c8_50, %c0_51] : memref<16x128xf32, #tpu.memory_space<vmem>>, vector<1x128xf32>
    %c0_52 = arith.constant 0 : index
    %c0_53 = arith.constant 0 : index
    %60 = vector.load %arg12[%c0_52, %c0_53] : memref<96x128xbf16, #tpu.memory_space<vmem>>, vector<80x128xbf16>
    %c0_54 = arith.constant 0 : index
    %c0_55 = arith.constant 0 : index
    %c0_56 = arith.constant 0 : index
    %61 = vector.load %arg4[%c0_54, %c0_55, %c0_56] : memref<3x128x128xbf16, #tpu.memory_space<vmem>>, vector<1x128x128xbf16>
    %62 = vector.shape_cast %61 : vector<1x128x128xbf16> to vector<128x128xbf16>
    %cst_57 = arith.constant dense<0.000000e+00> : vector<80x128xf32>
    %63 = tpu.matmul %60, %62, %cst_57 {dimension_numbers = #tpu.dot_dimension_numbers<[1], [0], [0], [1], [0, 0, 1, 1], [], []>} : vector<80x128xbf16>, vector<128x128xbf16>, vector<80x128xf32> -> vector<80x128xf32>
    %c8_58 = arith.constant 8 : index
    %c0_59 = arith.constant 0 : index
    %64 = vector.load %arg12[%c8_58, %c0_59] : memref<96x128xbf16, #tpu.memory_space<vmem>>, vector<80x128xbf16>
    %c1_60 = arith.constant 1 : index
    %c0_61 = arith.constant 0 : index
    %c0_62 = arith.constant 0 : index
    %65 = vector.load %arg4[%c1_60, %c0_61, %c0_62] : memref<3x128x128xbf16, #tpu.memory_space<vmem>>, vector<1x128x128xbf16>
    %66 = vector.shape_cast %65 : vector<1x128x128xbf16> to vector<128x128xbf16>
    %cst_63 = arith.constant dense<0.000000e+00> : vector<80x128xf32>
    %67 = tpu.matmul %64, %66, %cst_63 {dimension_numbers = #tpu.dot_dimension_numbers<[1], [0], [0], [1], [0, 0, 1, 1], [], []>} : vector<80x128xbf16>, vector<128x128xbf16>, vector<80x128xf32> -> vector<80x128xf32>
    %68 = arith.addf %63, %67 : vector<80x128xf32>
    %c16_64 = arith.constant 16 : index
    %c0_65 = arith.constant 0 : index
    %69 = vector.load %arg12[%c16_64, %c0_65] : memref<96x128xbf16, #tpu.memory_space<vmem>>, vector<80x128xbf16>
    %c2_66 = arith.constant 2 : index
    %c0_67 = arith.constant 0 : index
    %c0_68 = arith.constant 0 : index
    %70 = vector.load %arg4[%c2_66, %c0_67, %c0_68] : memref<3x128x128xbf16, #tpu.memory_space<vmem>>, vector<1x128x128xbf16>
    %71 = vector.shape_cast %70 : vector<1x128x128xbf16> to vector<128x128xbf16>
    %cst_69 = arith.constant dense<0.000000e+00> : vector<80x128xf32>
    %72 = tpu.matmul %69, %71, %cst_69 {dimension_numbers = #tpu.dot_dimension_numbers<[1], [0], [0], [1], [0, 0, 1, 1], [], []>} : vector<80x128xbf16>, vector<128x128xbf16>, vector<80x128xf32> -> vector<80x128xf32>
    %73 = arith.addf %68, %72 : vector<80x128xf32>
    %74 = vector.broadcast %57 : vector<1x128xf32> to vector<80x128xf32>
    %75 = arith.addf %73, %74 : vector<80x128xf32>
    %cst_70 = arith.constant 0.000000e+00 : f32
    %76 = vector.broadcast %cst_70 : f32 to vector<80x128xf32>
    %77 = arith.maximumf %75, %76 : vector<80x128xf32>
    %78 = vector.broadcast %58 : vector<1x128xf32> to vector<80x128xf32>
    %79 = arith.mulf %77, %78 : vector<80x128xf32>
    %80 = vector.broadcast %59 : vector<1x128xf32> to vector<80x128xf32>
    %81 = arith.addf %79, %80 : vector<80x128xf32>
    %82 = arith.truncf %81 : vector<80x128xf32> to vector<80x128xbf16>
    %c0_71 = arith.constant 0 : index
    %c0_72 = arith.constant 0 : index
    %83 = vector.load %arg11[%c0_71, %c0_72] : memref<112x128xbf16, #tpu.memory_space<vmem>>, vector<80x128xbf16>
    tpu.vector_store %arg11[%c0_71, %c0_72], %82 {strides = array<i32>} : memref<112x128xbf16, #tpu.memory_space<vmem>>, vector<80x128xbf16>,
    %c0_73 = arith.constant 0 : index
    %c0_74 = arith.constant 0 : index
    %84 = vector.load %arg11[%c0_73, %c0_74] : memref<112x128xbf16, #tpu.memory_space<vmem>>, vector<8x128xbf16>
    %c0_75 = arith.constant 0 : index
    %c0_76 = arith.constant 0 : index
    %c0_77 = arith.constant 0 : index
    %85 = vector.load %arg5[%c0_75, %c0_76, %c0_77] : memref<10x128x128xbf16, #tpu.memory_space<vmem>>, vector<1x128x128xbf16>
    %86 = vector.shape_cast %85 : vector<1x128x128xbf16> to vector<128x128xbf16>
    %cst_78 = arith.constant dense<0.000000e+00> : vector<8x128xf32>
    %87 = tpu.matmul %84, %86, %cst_78 {dimension_numbers = #tpu.dot_dimension_numbers<[1], [0], [0], [1], [0, 0, 1, 1], [], []>} : vector<8x128xbf16>, vector<128x128xbf16>, vector<8x128xf32> -> vector<8x128xf32>
    %c8_79 = arith.constant 8 : index
    %c0_80 = arith.constant 0 : index
    %88 = vector.load %arg11[%c8_79, %c0_80] : memref<112x128xbf16, #tpu.memory_space<vmem>>, vector<8x128xbf16>
    %c1_81 = arith.constant 1 : index
    %c0_82 = arith.constant 0 : index
    %c0_83 = arith.constant 0 : index
    %89 = vector.load %arg5[%c1_81, %c0_82, %c0_83] : memref<10x128x128xbf16, #tpu.memory_space<vmem>>, vector<1x128x128xbf16>
    %90 = vector.shape_cast %89 : vector<1x128x128xbf16> to vector<128x128xbf16>
    %cst_84 = arith.constant dense<0.000000e+00> : vector<8x128xf32>
    %91 = tpu.matmul %88, %90, %cst_84 {dimension_numbers = #tpu.dot_dimension_numbers<[1], [0], [0], [1], [0, 0, 1, 1], [], []>} : vector<8x128xbf16>, vector<128x128xbf16>, vector<8x128xf32> -> vector<8x128xf32>
    %92 = arith.addf %87, %91 : vector<8x128xf32>
    %c16_85 = arith.constant 16 : index
    %c0_86 = arith.constant 0 : index
    %93 = vector.load %arg11[%c16_85, %c0_86] : memref<112x128xbf16, #tpu.memory_space<vmem>>, vector<8x128xbf16>
    %c2_87 = arith.constant 2 : index
    %c0_88 = arith.constant 0 : index
    %c0_89 = arith.constant 0 : index
    %94 = vector.load %arg5[%c2_87, %c0_88, %c0_89] : memref<10x128x128xbf16, #tpu.memory_space<vmem>>, vector<1x128x128xbf16>
    %95 = vector.shape_cast %94 : vector<1x128x128xbf16> to vector<128x128xbf16>
    %cst_90 = arith.constant dense<0.000000e+00> : vector<8x128xf32>
    %96 = tpu.matmul %93, %95, %cst_90 {dimension_numbers = #tpu.dot_dimension_numbers<[1], [0], [0], [1], [0, 0, 1, 1], [], []>} : vector<8x128xbf16>, vector<128x128xbf16>, vector<8x128xf32> -> vector<8x128xf32>
    %97 = arith.addf %92, %96 : vector<8x128xf32>
    %c24 = arith.constant 24 : index
    %c0_91 = arith.constant 0 : index
    %98 = vector.load %arg11[%c24, %c0_91] : memref<112x128xbf16, #tpu.memory_space<vmem>>, vector<8x128xbf16>
    %c3_92 = arith.constant 3 : index
    %c0_93 = arith.constant 0 : index
    %c0_94 = arith.constant 0 : index
    %99 = vector.load %arg5[%c3_92, %c0_93, %c0_94] : memref<10x128x128xbf16, #tpu.memory_space<vmem>>, vector<1x128x128xbf16>
    %100 = vector.shape_cast %99 : vector<1x128x128xbf16> to vector<128x128xbf16>
    %cst_95 = arith.constant dense<0.000000e+00> : vector<8x128xf32>
    %101 = tpu.matmul %98, %100, %cst_95 {dimension_numbers = #tpu.dot_dimension_numbers<[1], [0], [0], [1], [0, 0, 1, 1], [], []>} : vector<8x128xbf16>, vector<128x128xbf16>, vector<8x128xf32> -> vector<8x128xf32>
    %102 = arith.addf %97, %101 : vector<8x128xf32>
    %c32 = arith.constant 32 : index
    %c0_96 = arith.constant 0 : index
    %103 = vector.load %arg11[%c32, %c0_96] : memref<112x128xbf16, #tpu.memory_space<vmem>>, vector<8x128xbf16>
    %c4_97 = arith.constant 4 : index
    %c0_98 = arith.constant 0 : index
    %c0_99 = arith.constant 0 : index
    %104 = vector.load %arg5[%c4_97, %c0_98, %c0_99] : memref<10x128x128xbf16, #tpu.memory_space<vmem>>, vector<1x128x128xbf16>
    %105 = vector.shape_cast %104 : vector<1x128x128xbf16> to vector<128x128xbf16>
    %cst_100 = arith.constant dense<0.000000e+00> : vector<8x128xf32>
    %106 = tpu.matmul %103, %105, %cst_100 {dimension_numbers = #tpu.dot_dimension_numbers<[1], [0], [0], [1], [0, 0, 1, 1], [], []>} : vector<8x128xbf16>, vector<128x128xbf16>, vector<8x128xf32> -> vector<8x128xf32>
    %107 = arith.addf %102, %106 : vector<8x128xf32>
    %c40 = arith.constant 40 : index
    %c0_101 = arith.constant 0 : index
    %108 = vector.load %arg11[%c40, %c0_101] : memref<112x128xbf16, #tpu.memory_space<vmem>>, vector<8x128xbf16>
    %c5_102 = arith.constant 5 : index
    %c0_103 = arith.constant 0 : index
    %c0_104 = arith.constant 0 : index
    %109 = vector.load %arg5[%c5_102, %c0_103, %c0_104] : memref<10x128x128xbf16, #tpu.memory_space<vmem>>, vector<1x128x128xbf16>
    %110 = vector.shape_cast %109 : vector<1x128x128xbf16> to vector<128x128xbf16>
    %cst_105 = arith.constant dense<0.000000e+00> : vector<8x128xf32>
    %111 = tpu.matmul %108, %110, %cst_105 {dimension_numbers = #tpu.dot_dimension_numbers<[1], [0], [0], [1], [0, 0, 1, 1], [], []>} : vector<8x128xbf16>, vector<128x128xbf16>, vector<8x128xf32> -> vector<8x128xf32>
    %112 = arith.addf %107, %111 : vector<8x128xf32>
    %c48 = arith.constant 48 : index
    %c0_106 = arith.constant 0 : index
    %113 = vector.load %arg11[%c48, %c0_106] : memref<112x128xbf16, #tpu.memory_space<vmem>>, vector<8x128xbf16>
    %c6_107 = arith.constant 6 : index
    %c0_108 = arith.constant 0 : index
    %c0_109 = arith.constant 0 : index
    %114 = vector.load %arg5[%c6_107, %c0_108, %c0_109] : memref<10x128x128xbf16, #tpu.memory_space<vmem>>, vector<1x128x128xbf16>
    %115 = vector.shape_cast %114 : vector<1x128x128xbf16> to vector<128x128xbf16>
    %cst_110 = arith.constant dense<0.000000e+00> : vector<8x128xf32>
    %116 = tpu.matmul %113, %115, %cst_110 {dimension_numbers = #tpu.dot_dimension_numbers<[1], [0], [0], [1], [0, 0, 1, 1], [], []>} : vector<8x128xbf16>, vector<128x128xbf16>, vector<8x128xf32> -> vector<8x128xf32>
    %117 = arith.addf %112, %116 : vector<8x128xf32>
    %c56 = arith.constant 56 : index
    %c0_111 = arith.constant 0 : index
    %118 = vector.load %arg11[%c56, %c0_111] : memref<112x128xbf16, #tpu.memory_space<vmem>>, vector<8x128xbf16>
    %c7_112 = arith.constant 7 : index
    %c0_113 = arith.constant 0 : index
    %c0_114 = arith.constant 0 : index
    %119 = vector.load %arg5[%c7_112, %c0_113, %c0_114] : memref<10x128x128xbf16, #tpu.memory_space<vmem>>, vector<1x128x128xbf16>
    %120 = vector.shape_cast %119 : vector<1x128x128xbf16> to vector<128x128xbf16>
    %cst_115 = arith.constant dense<0.000000e+00> : vector<8x128xf32>
    %121 = tpu.matmul %118, %120, %cst_115 {dimension_numbers = #tpu.dot_dimension_numbers<[1], [0], [0], [1], [0, 0, 1, 1], [], []>} : vector<8x128xbf16>, vector<128x128xbf16>, vector<8x128xf32> -> vector<8x128xf32>
    %122 = arith.addf %117, %121 : vector<8x128xf32>
    %c64 = arith.constant 64 : index
    %c0_116 = arith.constant 0 : index
    %123 = vector.load %arg11[%c64, %c0_116] : memref<112x128xbf16, #tpu.memory_space<vmem>>, vector<8x128xbf16>
    %c8_117 = arith.constant 8 : index
    %c0_118 = arith.constant 0 : index
    %c0_119 = arith.constant 0 : index
    %124 = vector.load %arg5[%c8_117, %c0_118, %c0_119] : memref<10x128x128xbf16, #tpu.memory_space<vmem>>, vector<1x128x128xbf16>
    %125 = vector.shape_cast %124 : vector<1x128x128xbf16> to vector<128x128xbf16>
    %cst_120 = arith.constant dense<0.000000e+00> : vector<8x128xf32>
    %126 = tpu.matmul %123, %125, %cst_120 {dimension_numbers = #tpu.dot_dimension_numbers<[1], [0], [0], [1], [0, 0, 1, 1], [], []>} : vector<8x128xbf16>, vector<128x128xbf16>, vector<8x128xf32> -> vector<8x128xf32>
    %127 = arith.addf %122, %126 : vector<8x128xf32>
    %c72 = arith.constant 72 : index
    %c0_121 = arith.constant 0 : index
    %128 = vector.load %arg11[%c72, %c0_121] : memref<112x128xbf16, #tpu.memory_space<vmem>>, vector<8x128xbf16>
    %c9 = arith.constant 9 : index
    %c0_122 = arith.constant 0 : index
    %c0_123 = arith.constant 0 : index
    %129 = vector.load %arg5[%c9, %c0_122, %c0_123] : memref<10x128x128xbf16, #tpu.memory_space<vmem>>, vector<1x128x128xbf16>
    %130 = vector.shape_cast %129 : vector<1x128x128xbf16> to vector<128x128xbf16>
    %cst_124 = arith.constant dense<0.000000e+00> : vector<8x128xf32>
    %131 = tpu.matmul %128, %130, %cst_124 {dimension_numbers = #tpu.dot_dimension_numbers<[1], [0], [0], [1], [0, 0, 1, 1], [], []>} : vector<8x128xbf16>, vector<128x128xbf16>, vector<8x128xf32> -> vector<8x128xf32>
    %132 = arith.addf %127, %131 : vector<8x128xf32>
    %c9_125 = arith.constant 9 : index
    %c0_126 = arith.constant 0 : index
    %133 = vector.load %arg9[%c9_125, %c0_126] : memref<16x128xf32, #tpu.memory_space<vmem>>, vector<1x128xf32>
    %134 = vector.broadcast %133 : vector<1x128xf32> to vector<8x128xf32>
    %135 = arith.addf %132, %134 : vector<8x128xf32>
    %cst_127 = arith.constant 0.000000e+00 : f32
    %136 = vector.broadcast %cst_127 : f32 to vector<8x128xf32>
    %137 = arith.maximumf %135, %136 : vector<8x128xf32>
    %138 = arith.truncf %137 : vector<8x128xf32> to vector<8x128xbf16>
    %c0_128 = arith.constant 0 : index
    %c0_129 = arith.constant 0 : index
    %139 = vector.load %arg6[%c0_128, %c0_129] : memref<128x128xbf16, #tpu.memory_space<vmem>>, vector<128x128xbf16>
    %cst_130 = arith.constant dense<0.000000e+00> : vector<8x128xf32>
    %140 = tpu.matmul %138, %139, %cst_130 {dimension_numbers = #tpu.dot_dimension_numbers<[1], [0], [0], [1], [0, 0, 1, 1], [], []>} : vector<8x128xbf16>, vector<128x128xbf16>, vector<8x128xf32> -> vector<8x128xf32>
    %c10 = arith.constant 10 : index
    %c0_131 = arith.constant 0 : index
    %141 = vector.load %arg9[%c10, %c0_131] : memref<16x128xf32, #tpu.memory_space<vmem>>, vector<1x128xf32>
    %142 = vector.broadcast %141 : vector<1x128xf32> to vector<8x128xf32>
    %143 = arith.addf %140, %142 : vector<8x128xf32>
    %cst_132 = arith.constant 0.000000e+00 : f32
    %144 = vector.broadcast %cst_132 : f32 to vector<8x128xf32>
    %145 = arith.maximumf %143, %144 : vector<8x128xf32>
    %146 = arith.truncf %145 : vector<8x128xf32> to vector<8x128xbf16>
    %c0_133 = arith.constant 0 : index
    %c0_134 = arith.constant 0 : index
    %147 = vector.load %arg7[%c0_133, %c0_134] : memref<128x128xbf16, #tpu.memory_space<vmem>>, vector<128x128xbf16>
    %cst_135 = arith.constant dense<0.000000e+00> : vector<8x128xf32>
    %148 = tpu.matmul %146, %147, %cst_135 {dimension_numbers = #tpu.dot_dimension_numbers<[1], [0], [0], [1], [0, 0, 1, 1], [], []>} : vector<8x128xbf16>, vector<128x128xbf16>, vector<8x128xf32> -> vector<8x128xf32>
    %c11 = arith.constant 11 : index
    %c0_136 = arith.constant 0 : index
    %149 = vector.load %arg9[%c11, %c0_136] : memref<16x128xf32, #tpu.memory_space<vmem>>, vector<1x128xf32>
    %150 = vector.broadcast %149 : vector<1x128xf32> to vector<8x128xf32>
    %151 = arith.addf %148, %150 : vector<8x128xf32>
    %cst_137 = arith.constant 0.000000e+00 : f32
    %152 = vector.broadcast %cst_137 : f32 to vector<8x128xf32>
    %153 = arith.maximumf %151, %152 : vector<8x128xf32>
    %154 = arith.truncf %153 : vector<8x128xf32> to vector<8x128xbf16>
    %c0_138 = arith.constant 0 : index
    %c0_139 = arith.constant 0 : index
    %155 = vector.load %arg8[%c0_138, %c0_139] : memref<128x128xbf16, #tpu.memory_space<vmem>>, vector<128x128xbf16>
    %cst_140 = arith.constant dense<0.000000e+00> : vector<8x128xf32>
    %156 = tpu.matmul %154, %155, %cst_140 {dimension_numbers = #tpu.dot_dimension_numbers<[1], [0], [0], [1], [0, 0, 1, 1], [], []>} : vector<8x128xbf16>, vector<128x128xbf16>, vector<8x128xf32> -> vector<8x128xf32>
    %c12 = arith.constant 12 : index
    %c0_141 = arith.constant 0 : index
    %157 = vector.load %arg9[%c12, %c0_141] : memref<16x128xf32, #tpu.memory_space<vmem>>, vector<1x128xf32>
    %158 = vector.broadcast %157 : vector<1x128xf32> to vector<8x128xf32>
    %159 = arith.addf %156, %158 : vector<8x128xf32>
    %c0_142 = arith.constant 0 : index
    %c0_143 = arith.constant 0 : index
    %c0_144 = arith.constant 0 : index
    %160 = vector.load %arg10[%c0_142, %c0_143, %c0_144] : memref<1x8x128xf32, #tpu.memory_space<vmem>>, vector<1x8x128xf32>
    %161 = vector.shape_cast %160 : vector<1x8x128xf32> to vector<8x128xf32>
    %162 = vector.shape_cast %159 : vector<8x128xf32> to vector<1x8x128xf32>
    tpu.vector_store %arg10[%c0_142, %c0_143, %c0_144], %162 {strides = array<i32>} : memref<1x8x128xf32, #tpu.memory_space<vmem>>, vector<1x8x128xf32>,
    return
  }
  func.func @transform_0(%arg0: i32) -> (i32, i32, i32) {
    %c0_i32 = arith.constant 0 : i32
    %c0_i32_0 = arith.constant 0 : i32
    %c0_i32_1 = arith.constant 0 : i32
    return %arg0, %c0_i32, %c0_i32_0 : i32, i32, i32
  }
  func.func @transform_1(%arg0: i32) -> (i32, i32, i32) {
    %c0_i32 = arith.constant 0 : i32
    %c0_i32_0 = arith.constant 0 : i32
    %c0_i32_1 = arith.constant 0 : i32
    %c0_i32_2 = arith.constant 0 : i32
    return %c0_i32, %c0_i32_0, %c0_i32_1 : i32, i32, i32
  }
  func.func @transform_2(%arg0: i32) -> (i32, i32, i32) {
    %c0_i32 = arith.constant 0 : i32
    %c0_i32_0 = arith.constant 0 : i32
    %c0_i32_1 = arith.constant 0 : i32
    %c0_i32_2 = arith.constant 0 : i32
    return %c0_i32, %c0_i32_0, %c0_i32_1 : i32, i32, i32
  }
  func.func @transform_3(%arg0: i32) -> (i32, i32, i32) {
    %c0_i32 = arith.constant 0 : i32
    %c0_i32_0 = arith.constant 0 : i32
    %c0_i32_1 = arith.constant 0 : i32
    %c0_i32_2 = arith.constant 0 : i32
    return %c0_i32, %c0_i32_0, %c0_i32_1 : i32, i32, i32
  }
  func.func @transform_4(%arg0: i32) -> (i32, i32, i32) {
    %c0_i32 = arith.constant 0 : i32
    %c0_i32_0 = arith.constant 0 : i32
    %c0_i32_1 = arith.constant 0 : i32
    %c0_i32_2 = arith.constant 0 : i32
    return %c0_i32, %c0_i32_0, %c0_i32_1 : i32, i32, i32
  }
  func.func @transform_5(%arg0: i32) -> (i32, i32) {
    %c0_i32 = arith.constant 0 : i32
    %c0_i32_0 = arith.constant 0 : i32
    %c0_i32_1 = arith.constant 0 : i32
    return %c0_i32, %c0_i32_0 : i32, i32
  }
  func.func @transform_6(%arg0: i32) -> (i32, i32) {
    %c0_i32 = arith.constant 0 : i32
    %c0_i32_0 = arith.constant 0 : i32
    %c0_i32_1 = arith.constant 0 : i32
    return %c0_i32, %c0_i32_0 : i32, i32
  }
  func.func @transform_7(%arg0: i32) -> (i32, i32) {
    %c0_i32 = arith.constant 0 : i32
    %c0_i32_0 = arith.constant 0 : i32
    %c0_i32_1 = arith.constant 0 : i32
    return %c0_i32, %c0_i32_0 : i32, i32
  }
  func.func @transform_8(%arg0: i32) -> (i32, i32) {
    %c0_i32 = arith.constant 0 : i32
    %c0_i32_0 = arith.constant 0 : i32
    %c0_i32_1 = arith.constant 0 : i32
    return %c0_i32, %c0_i32_0 : i32, i32
  }
  func.func @transform_9(%arg0: i32) -> (i32, i32, i32) {
    %c0_i32 = arith.constant 0 : i32
    %c0_i32_0 = arith.constant 0 : i32
    %c0_i32_1 = arith.constant 0 : i32
    return %arg0, %c0_i32, %c0_i32_0 : i32, i32, i32
  }
}

</mosaic_0001>

<llo_original>
// kernel: _lambda_.1
$region0: #{_lambda_.1}
  #allocation0 [shape = 'u32[]', space=smem, size = 0x4, offset = 0x4, fixed_abs, tag = 'smem constant byte address 0x4 - core index']
  #allocation1 [shape = 'u32[72,128]{1,0:T(1,128)}', space=vmem, size = 0x9000, scoped, tag = 'internal scratch']
  #allocation2 [shape = 'bf16[112,128]{1,0:T(8,128)(2,1)}', space=vmem, size = 0x7000, scoped, tag = 'scratch operand']
  #allocation3 [shape = 'bf16[96,128]{1,0:T(8,128)(2,1)}', space=vmem, size = 0x6000, scoped, tag = 'scratch operand']
  %s0 = inlined_call_operand.vmem [shape: bf16[2,128,128], index: 0, kind: input, shape index: {}]
  %s1 = inlined_call_operand.vmem [shape: bf16[3,128,128], index: 1, kind: input, shape index: {}]
  %s2 = inlined_call_operand.vmem [shape: bf16[3,128,128], index: 2, kind: input, shape index: {}]
  %s3 = inlined_call_operand.vmem [shape: bf16[3,128,128], index: 3, kind: input, shape index: {}]
  %s4 = inlined_call_operand.vmem [shape: bf16[10,128,128], index: 4, kind: input, shape index: {}]
  %s5 = inlined_call_operand.vmem [shape: bf16[128,128], index: 5, kind: input, shape index: {}]
  %s6 = inlined_call_operand.vmem [shape: bf16[128,128], index: 6, kind: input, shape index: {}]
  %s7 = inlined_call_operand.vmem [shape: bf16[128,128], index: 7, kind: input, shape index: {}]
  %s8 = inlined_call_operand.vmem [shape: f32[16,128], index: 8, kind: input, shape index: {}]
  %s9 = inlined_call_operand.vmem [shape: f32[2,8,128], index: 9, kind: output, shape index: {}]
  %s10 = sld [smem:[#allocation0]]
  $region69: #{_lambda_.1} parent=0
    _
  %s12 = ssub.s32 1, %s10
  %s13 = scalar_select 0, %s12, %s10
  loop: start=0, step=1, limit=4
  $region2: #{_lambda_.1} parent=0 // loop_pre_header
    _
  $region3: #{_lambda_.1} parent=0 // loop_header
    %s15 = sphi 0, %s19
    %p16 = scmp.ge.s32.totalorder %s15, 4
    %s25 = sphi 0, %s27
    %s28 = sphi 0, %s25
    %s29 = sphi 0, %s28
    %s45 = sphi 0, %s29
    %s49 = sphi 0, %s49
    %s51 = sphi 0, %s49
    %s52 = sphi 0, %s51
    %s66 = sphi 0, %s52
    %s70 = sphi 0, %s70
    %s72 = sphi 0, %s70
    %s73 = sphi 0, %s72
    %s87 = sphi 0, %s73
    %s91 = sphi 0, %s91
    %s93 = sphi 0, %s91
    %s94 = sphi 0, %s93
    %s108 = sphi 0, %s94
    %s112 = sphi 0, %s112
    %s114 = sphi 0, %s112
    %s115 = sphi 0, %s114
    %s129 = sphi 0, %s115
    %s133 = sphi 0, %s133
    %s135 = sphi 0, %s133
    %s136 = sphi 0, %s135
    %s150 = sphi 0, %s136
    %s154 = sphi 0, %s154
    %s156 = sphi 0, %s154
    %s157 = sphi 0, %s156
    %s171 = sphi 0, %s157
    %s175 = sphi 0, %s175
    %s177 = sphi 0, %s175
    %s178 = sphi 0, %s177
    %s192 = sphi 0, %s178
    %s196 = sphi 0, %s196
    %s198 = sphi 0, %s196
    %s199 = sphi 0, %s198
    %s213 = sphi 0, %s199
    %s219 = sphi 0, %s221
    %s222 = sphi 0, %s219
    %s223 = sphi 0, %s222
    %s239 = sphi 0, %s223
  $region4: #{_lambda_.1} parent=0 // loop_header_branch
    %18 = sbr.rel (%p16) target = $region8
  $region5: #{_lambda_.1} parent=0 // loop_body
    %s20 = ssub.s32 %s15, 1
    %s21 = ssub.s32 %s15, 2
    %s22 = sadd.s32 %s15, 1
    %s23 = ssub.s32 %s15, %s22
    %p24 = scmp.eq.s32.totalorder %s23, 0
    %s26 = sadd.s32 %s25, 1
    %s27 = scalar_select %p24, %s25, %s26
    %p30 = pneg %p24
    %p31 = scmp.eq.s32.totalorder %s15, 1
    %p32 = por %p30, %p31
    %p33 = scmp.ne.s32.totalorder %s25, %s28
    %p34 = scmp.eq.s32.totalorder %s15, 0
    %p35 = por %p33, %p34
    %p36 = scmp.ne.s32.totalorder %s25, %s28
    %p37 = scmp.eq.s32.totalorder %s20, 1
    %p38 = por %p36, %p37
    %p39 = scmp.ne.s32.totalorder %s28, %s29
    %p40 = scmp.eq.s32.totalorder %s20, 0
    %p41 = por %p39, %p40
    %p42 = scmp.ne.s32.totalorder %s28, %s29
    %p43 = scmp.eq.s32.totalorder %s21, 1
    %p44 = por %p42, %p43
    %p46 = scmp.ne.s32.totalorder %s29, %s45
    %p47 = scmp.eq.s32.totalorder %s21, 0
    %p48 = por %p46, %p47
    %s50 = sadd.s32 %s49, 1
    %p53 = scmp.eq.s32.totalorder %s15, 1
    %p54 = scmp.ne.s32.totalorder %s49, %s51
    %p55 = scmp.eq.s32.totalorder %s15, 0
    %p56 = por %p54, %p55
    %p57 = scmp.ne.s32.totalorder %s49, %s51
    %p58 = scmp.eq.s32.totalorder %s20, 1
    %p59 = por %p57, %p58
    %p60 = scmp.ne.s32.totalorder %s51, %s52
    %p61 = scmp.eq.s32.totalorder %s20, 0
    %p62 = por %p60, %p61
    %p63 = scmp.ne.s32.totalorder %s51, %s52
    %p64 = scmp.eq.s32.totalorder %s21, 1
    %p65 = por %p63, %p64
    %p67 = scmp.ne.s32.totalorder %s52, %s66
    %p68 = scmp.eq.s32.totalorder %s21, 0
    %p69 = por %p67, %p68
    %s71 = sadd.s32 %s70, 1
    %p74 = scmp.eq.s32.totalorder %s15, 1
    %p75 = scmp.ne.s32.totalorder %s70, %s72
    %p76 = scmp.eq.s32.totalorder %s15, 0
    %p77 = por %p75, %p76
    %p78 = scmp.ne.s32.totalorder %s70, %s72
    %p79 = scmp.eq.s32.totalorder %s20, 1
    %p80 = por %p78, %p79
    %p81 = scmp.ne.s32.totalorder %s72, %s73
    %p82 = scmp.eq.s32.totalorder %s20, 0
    %p83 = por %p81, %p82
    %p84 = scmp.ne.s32.totalorder %s72, %s73
    %p85 = scmp.eq.s32.totalorder %s21, 1
    %p86 = por %p84, %p85
    %p88 = scmp.ne.s32.totalorder %s73, %s87
    %p89 = scmp.eq.s32.totalorder %s21, 0
    %p90 = por %p88, %p89
    %s92 = sadd.s32 %s91, 1
    %p95 = scmp.eq.s32.totalorder %s15, 1
    %p96 = scmp.ne.s32.totalorder %s91, %s93
    %p97 = scmp.eq.s32.totalorder %s15, 0
    %p98 = por %p96, %p97
    %p99 = scmp.ne.s32.totalorder %s91, %s93
    %p100 = scmp.eq.s32.totalorder %s20, 1
    %p101 = por %p99, %p100
    %p102 = scmp.ne.s32.totalorder %s93, %s94
    %p103 = scmp.eq.s32.totalorder %s20, 0
    %p104 = por %p102, %p103
    %p105 = scmp.ne.s32.totalorder %s93, %s94
    %p106 = scmp.eq.s32.totalorder %s21, 1
    %p107 = por %p105, %p106
    %p109 = scmp.ne.s32.totalorder %s94, %s108
    %p110 = scmp.eq.s32.totalorder %s21, 0
    %p111 = por %p109, %p110
    %s113 = sadd.s32 %s112, 1
    %p116 = scmp.eq.s32.totalorder %s15, 1
    %p117 = scmp.ne.s32.totalorder %s112, %s114
    %p118 = scmp.eq.s32.totalorder %s15, 0
    %p119 = por %p117, %p118
    %p120 = scmp.ne.s32.totalorder %s112, %s114
    %p121 = scmp.eq.s32.totalorder %s20, 1
    %p122 = por %p120, %p121
    %p123 = scmp.ne.s32.totalorder %s114, %s115
    %p124 = scmp.eq.s32.totalorder %s20, 0
    %p125 = por %p123, %p124
    %p126 = scmp.ne.s32.totalorder %s114, %s115
    %p127 = scmp.eq.s32.totalorder %s21, 1
    %p128 = por %p126, %p127
    %p130 = scmp.ne.s32.totalorder %s115, %s129
    %p131 = scmp.eq.s32.totalorder %s21, 0
    %p132 = por %p130, %p131
    %s134 = sadd.s32 %s133, 1
    %p137 = scmp.eq.s32.totalorder %s15, 1
    %p138 = scmp.ne.s32.totalorder %s133, %s135
    %p139 = scmp.eq.s32.totalorder %s15, 0
    %p140 = por %p138, %p139
    %p141 = scmp.ne.s32.totalorder %s133, %s135
    %p142 = scmp.eq.s32.totalorder %s20, 1
    %p143 = por %p141, %p142
    %p144 = scmp.ne.s32.totalorder %s135, %s136
    %p145 = scmp.eq.s32.totalorder %s20, 0
    %p146 = por %p144, %p145
    %p147 = scmp.ne.s32.totalorder %s135, %s136
    %p148 = scmp.eq.s32.totalorder %s21, 1
    %p149 = por %p147, %p148
    %p151 = scmp.ne.s32.totalorder %s136, %s150
    %p152 = scmp.eq.s32.totalorder %s21, 0
    %p153 = por %p151, %p152
    %s155 = sadd.s32 %s154, 1
    %p158 = scmp.eq.s32.totalorder %s15, 1
    %p159 = scmp.ne.s32.totalorder %s154, %s156
    %p160 = scmp.eq.s32.totalorder %s15, 0
    %p161 = por %p159, %p160
    %p162 = scmp.ne.s32.totalorder %s154, %s156
    %p163 = scmp.eq.s32.totalorder %s20, 1
    %p164 = por %p162, %p163
    %p165 = scmp.ne.s32.totalorder %s156, %s157
    %p166 = scmp.eq.s32.totalorder %s20, 0
    %p167 = por %p165, %p166
    %p168 = scmp.ne.s32.totalorder %s156, %s157
    %p169 = scmp.eq.s32.totalorder %s21, 1
    %p170 = por %p168, %p169
    %p172 = scmp.ne.s32.totalorder %s157, %s171
    %p173 = scmp.eq.s32.totalorder %s21, 0
    %p174 = por %p172, %p173
    %s176 = sadd.s32 %s175, 1
    %p179 = scmp.eq.s32.totalorder %s15, 1
    %p180 = scmp.ne.s32.totalorder %s175, %s177
    %p181 = scmp.eq.s32.totalorder %s15, 0
    %p182 = por %p180, %p181
    %p183 = scmp.ne.s32.totalorder %s175, %s177
    %p184 = scmp.eq.s32.totalorder %s20, 1
    %p185 = por %p183, %p184
    %p186 = scmp.ne.s32.totalorder %s177, %s178
    %p187 = scmp.eq.s32.totalorder %s20, 0
    %p188 = por %p186, %p187
    %p189 = scmp.ne.s32.totalorder %s177, %s178
    %p190 = scmp.eq.s32.totalorder %s21, 1
    %p191 = por %p189, %p190
    %p193 = scmp.ne.s32.totalorder %s178, %s192
    %p194 = scmp.eq.s32.totalorder %s21, 0
    %p195 = por %p193, %p194
    %s197 = sadd.s32 %s196, 1
    %p200 = scmp.eq.s32.totalorder %s15, 1
    %p201 = scmp.ne.s32.totalorder %s196, %s198
    %p202 = scmp.eq.s32.totalorder %s15, 0
    %p203 = por %p201, %p202
    %p204 = scmp.ne.s32.totalorder %s196, %s198
    %p205 = scmp.eq.s32.totalorder %s20, 1
    %p206 = por %p204, %p205
    %p207 = scmp.ne.s32.totalorder %s198, %s199
    %p208 = scmp.eq.s32.totalorder %s20, 0
    %p209 = por %p207, %p208
    %p210 = scmp.ne.s32.totalorder %s198, %s199
    %p211 = scmp.eq.s32.totalorder %s21, 1
    %p212 = por %p210, %p211
    %p214 = scmp.ne.s32.totalorder %s199, %s213
    %p215 = scmp.eq.s32.totalorder %s21, 0
    %p216 = por %p214, %p215
    %s217 = ssub.s32 %s15, %s22
    %p218 = scmp.eq.s32.totalorder %s217, 0
    %s220 = sadd.s32 %s219, 1
    %s221 = scalar_select %p218, %s219, %s220
    %p224 = pneg %p218
    %p225 = scmp.eq.s32.totalorder %s15, 1
    %p226 = por %p224, %p225
    %p227 = scmp.ne.s32.totalorder %s219, %s222
    %p228 = scmp.eq.s32.totalorder %s15, 0
    %p229 = por %p227, %p228
    %p230 = scmp.ne.s32.totalorder %s219, %s222
    %p231 = scmp.eq.s32.totalorder %s20, 1
    %p232 = por %p230, %p231
    %p233 = scmp.ne.s32.totalorder %s222, %s223
    %p234 = scmp.eq.s32.totalorder %s20, 0
    %p235 = por %p233, %p234
    %p236 = scmp.ne.s32.totalorder %s222, %s223
    %p237 = scmp.eq.s32.totalorder %s21, 1
    %p238 = por %p236, %p237
    %p240 = scmp.ne.s32.totalorder %s223, %s239
    %p241 = scmp.eq.s32.totalorder %s21, 0
    %p242 = por %p240, %p241
    %p243 = scmp.le.s32.totalorder 1, %s15
    %p244 = scmp.lt.s32.totalorder %s15, 3
    %p245 = pnand %p243, %p244
    %p246 = pneg %p245
    // Predicated region
    $region9: #{_lambda_.1} parent=5 // pred_check
      _
    $region10: #{_lambda_.1} parent=5 // pred_check_branch
      %248 = sbr.rel (%p245) target = $region12
    $region11: #{_lambda_.1} parent=5 // pred_region
      %s249 = ssub.s32 %s15, 1
      // Predicated region
      $region13: #{_lambda_.1} parent=11 // pred_check
        %p250 = pneg %p62
      $region14: #{_lambda_.1} parent=11 // pred_check_branch
        %252 = sbr.rel (%p250) target = $region16
      $region15: #{_lambda_.1} parent=11 // pred_region
        _
      $region16: #{_lambda_.1} parent=11 // pred_fallthru
        _
      // Predicated region
      $region17: #{_lambda_.1} parent=11 // pred_check
        %p253 = pneg %p83
      $region18: #{_lambda_.1} parent=11 // pred_check_branch
        %255 = sbr.rel (%p253) target = $region20
      $region19: #{_lambda_.1} parent=11 // pred_region
        _
      $region20: #{_lambda_.1} parent=11 // pred_fallthru
        _
      // Predicated region
      $region21: #{_lambda_.1} parent=11 // pred_check
        %p256 = pneg %p104
      $region22: #{_lambda_.1} parent=11 // pred_check_branch
        %258 = sbr.rel (%p256) target = $region24
      $region23: #{_lambda_.1} parent=11 // pred_region
        _
      $region24: #{_lambda_.1} parent=11 // pred_fallthru
        _
      // Predicated region
      $region25: #{_lambda_.1} parent=11 // pred_check
        %p259 = pneg %p125
      $region26: #{_lambda_.1} parent=11 // pred_check_branch
        %261 = sbr.rel (%p259) target = $region28
      $region27: #{_lambda_.1} parent=11 // pred_region
        _
      $region28: #{_lambda_.1} parent=11 // pred_fallthru
        _
      // Predicated region
      $region29: #{_lambda_.1} parent=11 // pred_check
        %p262 = pneg %p146
      $region30: #{_lambda_.1} parent=11 // pred_check_branch
        %264 = sbr.rel (%p262) target = $region32
      $region31: #{_lambda_.1} parent=11 // pred_region
        _
      $region32: #{_lambda_.1} parent=11 // pred_fallthru
        _
      // Predicated region
      $region33: #{_lambda_.1} parent=11 // pred_check
        %p265 = pneg %p167
      $region34: #{_lambda_.1} parent=11 // pred_check_branch
        %267 = sbr.rel (%p265) target = $region36
      $region35: #{_lambda_.1} parent=11 // pred_region
        _
      $region36: #{_lambda_.1} parent=11 // pred_fallthru
        _
      // Predicated region
      $region37: #{_lambda_.1} parent=11 // pred_check
        %p268 = pneg %p188
      $region38: #{_lambda_.1} parent=11 // pred_check_branch
        %270 = sbr.rel (%p268) target = $region40
      $region39: #{_lambda_.1} parent=11 // pred_region
        _
      $region40: #{_lambda_.1} parent=11 // pred_fallthru
        _
      // Predicated region
      $region41: #{_lambda_.1} parent=11 // pred_check
        %p271 = pneg %p209
      $region42: #{_lambda_.1} parent=11 // pred_check_branch
        %273 = sbr.rel (%p271) target = $region44
      $region43: #{_lambda_.1} parent=11 // pred_region
        _
      $region44: #{_lambda_.1} parent=11 // pred_fallthru
        _
    $region12: #{_lambda_.1} parent=5 // pred_fallthru
      _
    %p274 = scmp.lt.s32.totalorder %s15, 2
    // Predicated region
    $region45: #{_lambda_.1} parent=5 // pred_check
      %p275 = pneg %p274
    $region46: #{_lambda_.1} parent=5 // pred_check_branch
      %277 = sbr.rel (%p275) target = $region48
    $region47: #{_lambda_.1} parent=5 // pred_region
      // Predicated region
      $region49: #{_lambda_.1} parent=47 // pred_check
        %p278 = pneg %p35
      $region50: #{_lambda_.1} parent=47 // pred_check_branch
        %280 = sbr.rel (%p278) target = $region52
      $region51: #{_lambda_.1} parent=47 // pred_region
        %p281 = scmp.lt.s32.totalorder %s15, 1
        %s282 = scalar_select %p281, %s15, 1
        %s283 = smul.addr %s282, 16
        %s284 = smul.addr %s283, 4
        %s285 = scalar_lea.vmem %s0, %s284
      $region52: #{_lambda_.1} parent=47 // pred_fallthru
        _
    $region48: #{_lambda_.1} parent=5 // pred_fallthru
      _
    %p286 = scmp.le.s32.totalorder 1, %s15
    %p287 = scmp.lt.s32.totalorder %s15, 3
    %p288 = pnand %p286, %p287
    %p289 = pneg %p288
    // Predicated region
    $region53: #{_lambda_.1} parent=5 // pred_check
      _
    $region54: #{_lambda_.1} parent=5 // pred_check_branch
      %291 = sbr.rel (%p288) target = $region56
    $region55: #{_lambda_.1} parent=5 // pred_region
      %s292 = ssub.s32 %s15, 1
      %p293 = scmp.lt.s32.totalorder %s20, 1
      %s294 = scalar_select %p293, %s20, 1
      %s295 = smul.addr %s294, 16
      %s296 = smul.addr %s295, 4
      %s297 = scalar_lea.vmem %s0, %s296
      %p298 = pneg %p41
      %p299 = pneg %p38
      %p300 = pneg %p62
      %p301 = pneg %p59
      %p302 = pneg %p83
      %p303 = pneg %p80
      %p304 = pneg %p104
      %p305 = pneg %p101
      %p306 = pneg %p125
      %p307 = pneg %p122
      %p308 = pneg %p146
      %p309 = pneg %p143
      %p310 = pneg %p167
      %p311 = pneg %p164
      %p312 = pneg %p188
      %p313 = pneg %p185
      %p314 = pneg %p209
      %p315 = pneg %p206
      %p316 = pneg %p235
      %p317 = pneg %p232
      %p318 = scmp.lt.s32.totalorder %s20, 1
      %s319 = scalar_select %p318, %s20, 1
      %s320 = smul.addr %s319, 8
      %s321 = scalar_lea.vmem %s9, %s320
      %p322 = scmp.lt.s32.totalorder %s20, 1
      %s323 = scalar_select %p322, %s20, 1
      %s324 = smul.addr %s323, 16
      %s325 = smul.addr %s324, 4
      %s326 = scalar_lea.vmem %s0, %s325
      %p327 = scmp.lt.s32.totalorder %s20, 1
      %s328 = scalar_select %p327, %s20, 1
      %s329 = smul.addr %s328, 8
      %s330 = scalar_lea.vmem %s9, %s329
      %v331 = vld [vmem:[%s8] sm:$0x1]
      %v332 = vld [vmem:[%s8 + $0x1] sm:$0x1]
      %v333 = vld [vmem:[%s8 + $0x2] sm:$0x1]
      %v334 = vld [vmem:[%s326] sm:$0xf]
      %v335 = vld [vmem:[%s326 + $0x4] sm:$0xf]
      %v336 = vld [vmem:[%s326 + $0x8] sm:$0xf]
      %v337 = vld [vmem:[%s326 + $0xc] sm:$0xf]
      %v338 = vld [vmem:[%s326 + $0x10] sm:$0xf]
      %v339 = vld [vmem:[%s326 + $0x14] sm:$0xf]
      %v340 = vld [vmem:[%s326 + $0x18] sm:$0xf]
      %v341 = vld [vmem:[%s326 + $0x1c] sm:$0xf]
      %v342 = vld [vmem:[%s326 + $0x20] sm:$0xf]
      %v343 = vld [vmem:[%s326 + $0x24] sm:$0xf]
      %v344 = vld [vmem:[%s326 + $0x28] sm:$0xf]
      %v345 = vld [vmem:[%s326 + $0x2c] sm:$0xf]
      %v346 = vld [vmem:[%s326 + $0x30] sm:$0xf]
      %v347 = vld [vmem:[%s326 + $0x34] sm:$0xf]
      %v348 = vld [vmem:[%s1] sm:$0xf]
      %v349 = vld [vmem:[%s1 + $0x4] sm:$0xf]
      %v350 = vld [vmem:[%s1 + $0x8] sm:$0xf]
      %v351 = vld [vmem:[%s1 + $0xc] sm:$0xf]
      %v352 = vld [vmem:[%s1 + $0x10] sm:$0xf]
      %v353 = vld [vmem:[%s1 + $0x14] sm:$0xf]
      %v354 = vld [vmem:[%s1 + $0x18] sm:$0xf]
      %v355 = vld [vmem:[%s1 + $0x1c] sm:$0xf]
      %v356 = vld [vmem:[%s1 + $0x20] sm:$0xf]
      %v357 = vld [vmem:[%s1 + $0x24] sm:$0xf]
      %v358 = vld [vmem:[%s1 + $0x28] sm:$0xf]
      %v359 = vld [vmem:[%s1 + $0x2c] sm:$0xf]
      %v360 = vld [vmem:[%s1 + $0x30] sm:$0xf]
      %v361 = vld [vmem:[%s1 + $0x34] sm:$0xf]
      %v362 = vld [vmem:[%s1 + $0x38] sm:$0xf]
      %v363 = vld [vmem:[%s1 + $0x3c] sm:$0xf]
      %v364 = vld [vmem:[%s326 + $0x38] sm:$0xf]
      %s365 = scalar_lea.vmem %s1, 64
      %v366 = vld [vmem:[%s365] sm:$0xf]
      %v367 = vld [vmem:[%s365 + $0x4] sm:$0xf]
      %v368 = vld [vmem:[%s365 + $0x8] sm:$0xf]
      %v369 = vld [vmem:[%s365 + $0xc] sm:$0xf]
      %v370 = vld [vmem:[%s365 + $0x10] sm:$0xf]
      %v371 = vld [vmem:[%s365 + $0x14] sm:$0xf]
      %v372 = vld [vmem:[%s365 + $0x18] sm:$0xf]
      %v373 = vld [vmem:[%s365 + $0x1c] sm:$0xf]
      %v374 = vld [vmem:[%s365 + $0x20] sm:$0xf]
      %v375 = vld [vmem:[%s365 + $0x24] sm:$0xf]
      %v376 = vld [vmem:[%s365 + $0x28] sm:$0xf]
      %v377 = vld [vmem:[%s365 + $0x2c] sm:$0xf]
      %v378 = vld [vmem:[%s365 + $0x30] sm:$0xf]
      %v379 = vld [vmem:[%s365 + $0x34] sm:$0xf]
      %v380 = vld [vmem:[%s365 + $0x38] sm:$0xf]
      %v381 = vld [vmem:[%s365 + $0x3c] sm:$0xf]
      %v396 = vunpack.c.l.b16 %v335
      %v397 = vunpack.c.l.b16 %v336
      %v398 = vunpack.c.l.b16 %v337
      %v399 = vunpack.c.l.b16 %v338
      %v400 = vunpack.c.l.b16 %v339
      %v401 = vunpack.c.l.b16 %v340
      %v402 = vunpack.c.l.b16 %v341
      %v403 = vunpack.c.l.b16 %v342
      %v404 = vunpack.c.l.b16 %v343
      %v405 = vunpack.c.l.b16 %v344
      %v406 = vunpack.c.l.b16 %v345
      %v407 = vunpack.c.l.b16 %v346
      %v408 = vunpack.c.l.b16 %v347
      %v409 = vunpack.c.l.b16 %v364
      %v410 = vpack.c.b16 %v397, %v396
      %v411 = vpack.c.b16 %v399, %v398
      %v412 = vpack.c.b16 %v401, %v400
      %v413 = vpack.c.b16 %v403, %v402
      %v414 = vpack.c.b16 %v405, %v404
      %v415 = vpack.c.b16 %v407, %v406
      %v416 = vpack.c.b16 %v409, %v408
      %v440 = vunpack.c.l.b16 %v366
      %v441 = vunpack.c.l.b16 %v367
      %v442 = vunpack.c.l.b16 %v368
      %v443 = vunpack.c.l.b16 %v369
      %v444 = vunpack.c.l.b16 %v370
      %v445 = vunpack.c.l.b16 %v371
      %v446 = vunpack.c.l.b16 %v372
      %v447 = vunpack.c.l.b16 %v373
      %v448 = vunpack.c.l.b16 %v374
      %v449 = vunpack.c.l.b16 %v375
      %v450 = vunpack.c.l.b16 %v376
      %v451 = vunpack.c.l.b16 %v377
      %v452 = vunpack.c.l.b16 %v378
      %v453 = vunpack.c.l.b16 %v379
      %v454 = vunpack.c.l.b16 %v380
      %v455 = vunpack.c.l.b16 %v381
      %v456 = vpack.c.b16 %v441, %v440
      %v457 = vpack.c.b16 %v443, %v442
      %v458 = vpack.c.b16 %v445, %v444
      %v459 = vpack.c.b16 %v447, %v446
      %v460 = vpack.c.b16 %v449, %v448
      %v461 = vpack.c.b16 %v451, %v450
      %v462 = vpack.c.b16 %v453, %v452
      %v463 = vpack.c.b16 %v455, %v454
      %472 = vmatpush.bf16.msra.mxu0 %v463
      %473 = vmatpush.bf16.msra.mxu0 %v462
      %474 = vmatpush.bf16.msra.mxu0 %v461
      %475 = vmatpush.bf16.msra.mxu0 %v460
      %476 = vmatpush.bf16.msra.mxu0 %v459
      %477 = vmatpush.bf16.msra.mxu0 %v458
      %478 = vmatpush.bf16.msra.mxu0 %v457
      %479 = vmatpush.bf16.msra.mxu0 %v456
      %480 = vmatmul.bf16.gmra.mxu0 %v410
      %v481 = vpop.f32.mrf.mxu0
      %v482 = vadd.f32 0.0, %v481
      %v483 = vpop.f32.mrf.mxu0
      %v484 = vadd.f32 0.0, %v483
      %485 = vmatmul.bf16.gmra.mxu0 %v411
      %v486 = vpop.f32.mrf.mxu0
      %v487 = vadd.f32 0.0, %v486
      %v488 = vpop.f32.mrf.mxu0
      %v489 = vadd.f32 0.0, %v488
      %490 = vmatmul.bf16.gmra.mxu0 %v412
      %v491 = vpop.f32.mrf.mxu0
      %v492 = vadd.f32 0.0, %v491
      %v493 = vpop.f32.mrf.mxu0
      %v494 = vadd.f32 0.0, %v493
      %495 = vmatmul.bf16.gmra.mxu0 %v413
      %v496 = vpop.f32.mrf.mxu0
      %v497 = vadd.f32 0.0, %v496
      %v498 = vpop.f32.mrf.mxu0
      %v499 = vadd.f32 0.0, %v498
      %500 = vmatmul.bf16.gmra.mxu0 %v414
      %v501 = vpop.f32.mrf.mxu0
      %v502 = vadd.f32 0.0, %v501
      %v503 = vpop.f32.mrf.mxu0
      %v504 = vadd.f32 0.0, %v503
      %505 = vmatmul.bf16.gmra.mxu0 %v415
      %v506 = vpop.f32.mrf.mxu0
      %v507 = vadd.f32 0.0, %v506
      %v508 = vpop.f32.mrf.mxu0
      %v509 = vadd.f32 0.0, %v508
      %510 = vmatmul.bf16.gmra.mxu0 %v416
      %v511 = vpop.f32.mrf.mxu0
      %v512 = vadd.f32 0.0, %v511
      %v513 = vpop.f32.mrf.mxu0
      %v514 = vadd.f32 0.0, %v513
      %515 = vdwg.mxu0
      %v517 = vunpack.c.l.b16 %v334
      %v518 = vpack.c.b16 %v396, %v517
      %v519 = vpack.c.b16 %v398, %v397
      %v520 = vpack.c.b16 %v400, %v399
      %v521 = vpack.c.b16 %v402, %v401
      %v522 = vpack.c.b16 %v404, %v403
      %v523 = vpack.c.b16 %v406, %v405
      %v524 = vpack.c.b16 %v408, %v407
      %v548 = vunpack.c.l.b16 %v348
      %v549 = vunpack.c.l.b16 %v349
      %v550 = vunpack.c.l.b16 %v350
      %v551 = vunpack.c.l.b16 %v351
      %v552 = vunpack.c.l.b16 %v352
      %v553 = vunpack.c.l.b16 %v353
      %v554 = vunpack.c.l.b16 %v354
      %v555 = vunpack.c.l.b16 %v355
      %v556 = vunpack.c.l.b16 %v356
      %v557 = vunpack.c.l.b16 %v357
      %v558 = vunpack.c.l.b16 %v358
      %v559 = vunpack.c.l.b16 %v359
      %v560 = vunpack.c.l.b16 %v360
      %v561 = vunpack.c.l.b16 %v361
      %v562 = vunpack.c.l.b16 %v362
      %v563 = vunpack.c.l.b16 %v363
      %v564 = vpack.c.b16 %v549, %v548
      %v565 = vpack.c.b16 %v551, %v550
      %v566 = vpack.c.b16 %v553, %v552
      %v567 = vpack.c.b16 %v555, %v554
      %v568 = vpack.c.b16 %v557, %v556
      %v569 = vpack.c.b16 %v559, %v558
      %v570 = vpack.c.b16 %v561, %v560
      %v571 = vpack.c.b16 %v563, %v562
      %580 = vmatpush.bf16.msra.mxu0 %v571
      %581 = vmatpush.bf16.msra.mxu0 %v570
      %582 = vmatpush.bf16.msra.mxu0 %v569
      %583 = vmatpush.bf16.msra.mxu0 %v568
      %584 = vmatpush.bf16.msra.mxu0 %v567
      %585 = vmatpush.bf16.msra.mxu0 %v566
      %586 = vmatpush.bf16.msra.mxu0 %v565
      %587 = vmatpush.bf16.msra.mxu0 %v564
      %588 = vmatmul.bf16.gmra.mxu0 %v518
      %v589 = vpop.f32.mrf.mxu0
      %v590 = vadd.f32 %v482, %v589
      %v591 = vpop.f32.mrf.mxu0
      %v592 = vadd.f32 %v484, %v591
      %593 = vmatmul.bf16.gmra.mxu0 %v519
      %v594 = vpop.f32.mrf.mxu0
      %v595 = vadd.f32 %v487, %v594
      %v596 = vpop.f32.mrf.mxu0
      %v597 = vadd.f32 %v489, %v596
      %598 = vmatmul.bf16.gmra.mxu0 %v520
      %v599 = vpop.f32.mrf.mxu0
      %v600 = vadd.f32 %v492, %v599
      %v601 = vpop.f32.mrf.mxu0
      %v602 = vadd.f32 %v494, %v601
      %603 = vmatmul.bf16.gmra.mxu0 %v521
      %v604 = vpop.f32.mrf.mxu0
      %v605 = vadd.f32 %v497, %v604
      %v606 = vpop.f32.mrf.mxu0
      %v607 = vadd.f32 %v499, %v606
      %608 = vmatmul.bf16.gmra.mxu0 %v522
      %v609 = vpop.f32.mrf.mxu0
      %v610 = vadd.f32 %v502, %v609
      %v611 = vpop.f32.mrf.mxu0
      %v612 = vadd.f32 %v504, %v611
      %613 = vmatmul.bf16.gmra.mxu0 %v523
      %v614 = vpop.f32.mrf.mxu0
      %v615 = vadd.f32 %v507, %v614
      %v616 = vpop.f32.mrf.mxu0
      %v617 = vadd.f32 %v509, %v616
      %618 = vmatmul.bf16.gmra.mxu0 %v524
      %v619 = vpop.f32.mrf.mxu0
      %v620 = vadd.f32 %v512, %v619
      %v621 = vpop.f32.mrf.mxu0
      %v622 = vadd.f32 %v514, %v621
      %623 = vdwg.mxu0
      %v624 = vld [vmem:[%s326 + $0x8] sm:$0xf]
      %v625 = vld [vmem:[%s326 + $0xc] sm:$0xf]
      %v626 = vld [vmem:[%s326 + $0x10] sm:$0xf]
      %v627 = vld [vmem:[%s326 + $0x14] sm:$0xf]
      %v628 = vld [vmem:[%s326 + $0x18] sm:$0xf]
      %v629 = vld [vmem:[%s326 + $0x1c] sm:$0xf]
      %v630 = vld [vmem:[%s326 + $0x20] sm:$0xf]
      %v631 = vld [vmem:[%s326 + $0x24] sm:$0xf]
      %v632 = vld [vmem:[%s326 + $0x28] sm:$0xf]
      %v633 = vld [vmem:[%s326 + $0x2c] sm:$0xf]
      %v634 = vld [vmem:[%s326 + $0x30] sm:$0xf]
      %v635 = vld [vmem:[%s326 + $0x34] sm:$0xf]
      %v636 = vld [vmem:[%s326 + $0x38] sm:$0xf]
      %v637 = vld [vmem:[%s326 + $0x3c] sm:$0xf]
      %s638 = scalar_lea.vmem %s1, 128
      %v639 = vld [vmem:[%s638] sm:$0xf]
      %v640 = vld [vmem:[%s638 + $0x4] sm:$0xf]
      %v641 = vld [vmem:[%s638 + $0x8] sm:$0xf]
      %v642 = vld [vmem:[%s638 + $0xc] sm:$0xf]
      %v643 = vld [vmem:[%s638 + $0x10] sm:$0xf]
      %v644 = vld [vmem:[%s638 + $0x14] sm:$0xf]
      %v645 = vld [vmem:[%s638 + $0x18] sm:$0xf]
      %v646 = vld [vmem:[%s638 + $0x1c] sm:$0xf]
      %v647 = vld [vmem:[%s638 + $0x20] sm:$0xf]
      %v648 = vld [vmem:[%s638 + $0x24] sm:$0xf]
      %v649 = vld [vmem:[%s638 + $0x28] sm:$0xf]
      %v650 = vld [vmem:[%s638 + $0x2c] sm:$0xf]
      %v651 = vld [vmem:[%s638 + $0x30] sm:$0xf]
      %v652 = vld [vmem:[%s638 + $0x34] sm:$0xf]
      %v653 = vld [vmem:[%s638 + $0x38] sm:$0xf]
      %v654 = vld [vmem:[%s638 + $0x3c] sm:$0xf]
      %v669 = vunpack.c.l.b16 %v624
      %v670 = vunpack.c.l.b16 %v625
      %v671 = vunpack.c.l.b16 %v626
      %v672 = vunpack.c.l.b16 %v627
      %v673 = vunpack.c.l.b16 %v628
      %v674 = vunpack.c.l.b16 %v629
      %v675 = vunpack.c.l.b16 %v630
      %v676 = vunpack.c.l.b16 %v631
      %v677 = vunpack.c.l.b16 %v632
      %v678 = vunpack.c.l.b16 %v633
      %v679 = vunpack.c.l.b16 %v634
      %v680 = vunpack.c.l.b16 %v635
      %v681 = vunpack.c.l.b16 %v636
      %v682 = vunpack.c.l.b16 %v637
      %v683 = vpack.c.b16 %v670, %v669
      %v684 = vpack.c.b16 %v672, %v671
      %v685 = vpack.c.b16 %v674, %v673
      %v686 = vpack.c.b16 %v676, %v675
      %v687 = vpack.c.b16 %v678, %v677
      %v688 = vpack.c.b16 %v680, %v679
      %v689 = vpack.c.b16 %v682, %v681
      %v713 = vunpack.c.l.b16 %v639
      %v714 = vunpack.c.l.b16 %v640
      %v715 = vunpack.c.l.b16 %v641
      %v716 = vunpack.c.l.b16 %v642
      %v717 = vunpack.c.l.b16 %v643
      %v718 = vunpack.c.l.b16 %v644
      %v719 = vunpack.c.l.b16 %v645
      %v720 = vunpack.c.l.b16 %v646
      %v721 = vunpack.c.l.b16 %v647
      %v722 = vunpack.c.l.b16 %v648
      %v723 = vunpack.c.l.b16 %v649
      %v724 = vunpack.c.l.b16 %v650
      %v725 = vunpack.c.l.b16 %v651
      %v726 = vunpack.c.l.b16 %v652
      %v727 = vunpack.c.l.b16 %v653
      %v728 = vunpack.c.l.b16 %v654
      %v729 = vpack.c.b16 %v714, %v713
      %v730 = vpack.c.b16 %v716, %v715
      %v731 = vpack.c.b16 %v718, %v717
      %v732 = vpack.c.b16 %v720, %v719
      %v733 = vpack.c.b16 %v722, %v721
      %v734 = vpack.c.b16 %v724, %v723
      %v735 = vpack.c.b16 %v726, %v725
      %v736 = vpack.c.b16 %v728, %v727
      %745 = vmatpush.bf16.msra.mxu0 %v736
      %746 = vmatpush.bf16.msra.mxu0 %v735
      %747 = vmatpush.bf16.msra.mxu0 %v734
      %748 = vmatpush.bf16.msra.mxu0 %v733
      %749 = vmatpush.bf16.msra.mxu0 %v732
      %750 = vmatpush.bf16.msra.mxu0 %v731
      %751 = vmatpush.bf16.msra.mxu0 %v730
      %752 = vmatpush.bf16.msra.mxu0 %v729
      %753 = vmatmul.bf16.gmra.mxu0 %v683
      %v754 = vpop.f32.mrf.mxu0
      %v755 = vadd.f32 0.0, %v754
      %v756 = vpop.f32.mrf.mxu0
      %v757 = vadd.f32 0.0, %v756
      %758 = vmatmul.bf16.gmra.mxu0 %v684
      %v759 = vpop.f32.mrf.mxu0
      %v760 = vadd.f32 0.0, %v759
      %v761 = vpop.f32.mrf.mxu0
      %v762 = vadd.f32 0.0, %v761
      %763 = vmatmul.bf16.gmra.mxu0 %v685
      %v764 = vpop.f32.mrf.mxu0
      %v765 = vadd.f32 0.0, %v764
      %v766 = vpop.f32.mrf.mxu0
      %v767 = vadd.f32 0.0, %v766
      %768 = vmatmul.bf16.gmra.mxu0 %v686
      %v769 = vpop.f32.mrf.mxu0
      %v770 = vadd.f32 0.0, %v769
      %v771 = vpop.f32.mrf.mxu0
      %v772 = vadd.f32 0.0, %v771
      %773 = vmatmul.bf16.gmra.mxu0 %v687
      %v774 = vpop.f32.mrf.mxu0
      %v775 = vadd.f32 0.0, %v774
      %v776 = vpop.f32.mrf.mxu0
      %v777 = vadd.f32 0.0, %v776
      %778 = vmatmul.bf16.gmra.mxu0 %v688
      %v779 = vpop.f32.mrf.mxu0
      %v780 = vadd.f32 0.0, %v779
      %v781 = vpop.f32.mrf.mxu0
      %v782 = vadd.f32 0.0, %v781
      %783 = vmatmul.bf16.gmra.mxu0 %v689
      %v784 = vpop.f32.mrf.mxu0
      %v785 = vadd.f32 0.0, %v784
      %v786 = vpop.f32.mrf.mxu0
      %v787 = vadd.f32 0.0, %v786
      %788 = vdwg.mxu0
      %v789 = vadd.f32 %v590, %v755
      %v790 = vadd.f32 %v592, %v757
      %v791 = vadd.f32 %v595, %v760
      %v792 = vadd.f32 %v597, %v762
      %v793 = vadd.f32 %v600, %v765
      %v794 = vadd.f32 %v602, %v767
      %v795 = vadd.f32 %v605, %v770
      %v796 = vadd.f32 %v607, %v772
      %v797 = vadd.f32 %v610, %v775
      %v798 = vadd.f32 %v612, %v777
      %v799 = vadd.f32 %v615, %v780
      %v800 = vadd.f32 %v617, %v782
      %v801 = vadd.f32 %v620, %v785
      %v802 = vadd.f32 %v622, %v787
      %v803 = vperm.slane %v331, 0
      %v804 = vadd.f32 %v789, %v803
      %v805 = vadd.f32 %v790, %v803
      %v806 = vadd.f32 %v791, %v803
      %v807 = vadd.f32 %v792, %v803
      %v808 = vadd.f32 %v793, %v803
      %v809 = vadd.f32 %v794, %v803
      %v810 = vadd.f32 %v795, %v803
      %v811 = vadd.f32 %v796, %v803
      %v812 = vadd.f32 %v797, %v803
      %v813 = vadd.f32 %v798, %v803
      %v814 = vadd.f32 %v799, %v803
      %v815 = vadd.f32 %v800, %v803
      %v816 = vadd.f32 %v801, %v803
      %v817 = vadd.f32 %v802, %v803
      %v818 = vmax.f32 %v804, 0.0
      %v819 = vmax.f32 %v805, 0.0
      %v820 = vmax.f32 %v806, 0.0
      %v821 = vmax.f32 %v807, 0.0
      %v822 = vmax.f32 %v808, 0.0
      %v823 = vmax.f32 %v809, 0.0
      %v824 = vmax.f32 %v810, 0.0
      %v825 = vmax.f32 %v811, 0.0
      %v826 = vmax.f32 %v812, 0.0
      %v827 = vmax.f32 %v813, 0.0
      %v828 = vmax.f32 %v814, 0.0
      %v829 = vmax.f32 %v815, 0.0
      %v830 = vmax.f32 %v816, 0.0
      %v831 = vmax.f32 %v817, 0.0
      %v832 = vperm.slane %v332, 0
      %v833 = vmul.f32 %v818, %v832
      %v834 = vmul.f32 %v819, %v832
      %v835 = vmul.f32 %v820, %v832
      %v836 = vmul.f32 %v821, %v832
      %v837 = vmul.f32 %v822, %v832
      %v838 = vmul.f32 %v823, %v832
      %v839 = vmul.f32 %v824, %v832
      %v840 = vmul.f32 %v825, %v832
      %v841 = vmul.f32 %v826, %v832
      %v842 = vmul.f32 %v827, %v832
      %v843 = vmul.f32 %v828, %v832
      %v844 = vmul.f32 %v829, %v832
      %v845 = vmul.f32 %v830, %v832
      %v846 = vmul.f32 %v831, %v832
      %v847 = vperm.slane %v333, 0
      %v848 = vadd.f32 %v833, %v847
      %v849 = vadd.f32 %v834, %v847
      %v850 = vadd.f32 %v835, %v847
      %v851 = vadd.f32 %v836, %v847
      %v852 = vadd.f32 %v837, %v847
      %v853 = vadd.f32 %v838, %v847
      %v854 = vadd.f32 %v839, %v847
      %v855 = vadd.f32 %v840, %v847
      %v856 = vadd.f32 %v841, %v847
      %v857 = vadd.f32 %v842, %v847
      %v858 = vadd.f32 %v843, %v847
      %v859 = vadd.f32 %v844, %v847
      %v860 = vadd.f32 %v845, %v847
      %v861 = vadd.f32 %v846, %v847
      %v862 = vpack.c.bf16 %v848, %v848
      %v863 = vpack.c.bf16 %v849, %v849
      %v864 = vpack.c.bf16 %v850, %v850
      %v865 = vpack.c.bf16 %v851, %v851
      %v866 = vpack.c.bf16 %v852, %v852
      %v867 = vpack.c.bf16 %v853, %v853
      %v868 = vpack.c.bf16 %v854, %v854
      %v869 = vpack.c.bf16 %v855, %v855
      %v870 = vpack.c.bf16 %v856, %v856
      %v871 = vpack.c.bf16 %v857, %v857
      %v872 = vpack.c.bf16 %v858, %v858
      %v873 = vpack.c.bf16 %v859, %v859
      %v874 = vpack.c.bf16 %v860, %v860
      %v875 = vpack.c.bf16 %v861, %v861
      %876 = vst [vmem:[#allocation2] sm:$0xf] %v862
      %877 = vst [vmem:[#allocation2 + $0x4] sm:$0xf] %v863
      %878 = vst [vmem:[#allocation2 + $0x8] sm:$0xf] %v864
      %879 = vst [vmem:[#allocation2 + $0xc] sm:$0xf] %v865
      %880 = vst [vmem:[#allocation2 + $0x10] sm:$0xf] %v866
      %881 = vst [vmem:[#allocation2 + $0x14] sm:$0xf] %v867
      %882 = vst [vmem:[#allocation2 + $0x18] sm:$0xf] %v868
      %883 = vst [vmem:[#allocation2 + $0x1c] sm:$0xf] %v869
      %884 = vst [vmem:[#allocation2 + $0x20] sm:$0xf] %v870
      %885 = vst [vmem:[#allocation2 + $0x24] sm:$0xf] %v871
      %886 = vst [vmem:[#allocation2 + $0x28] sm:$0xf] %v872
      %887 = vst [vmem:[#allocation2 + $0x2c] sm:$0xf] %v873
      %888 = vst [vmem:[#allocation2 + $0x30] sm:$0xf] %v874
      %889 = vst [vmem:[#allocation2 + $0x34] sm:$0xf] %v875
      %v890 = vld [vmem:[%s8 + $0x3] sm:$0x1]
      %v891 = vld [vmem:[%s8 + $0x4] sm:$0x1]
      %v892 = vld [vmem:[%s8 + $0x5] sm:$0x1]
      %v893 = vld [vmem:[#allocation2] sm:$0xf]
      %v894 = vld [vmem:[#allocation2 + $0x4] sm:$0xf]
      %v895 = vld [vmem:[#allocation2 + $0x8] sm:$0xf]
      %v896 = vld [vmem:[#allocation2 + $0xc] sm:$0xf]
      %v897 = vld [vmem:[#allocation2 + $0x10] sm:$0xf]
      %v898 = vld [vmem:[#allocation2 + $0x14] sm:$0xf]
      %v899 = vld [vmem:[#allocation2 + $0x18] sm:$0xf]
      %v900 = vld [vmem:[#allocation2 + $0x1c] sm:$0xf]
      %v901 = vld [vmem:[#allocation2 + $0x20] sm:$0xf]
      %v902 = vld [vmem:[#allocation2 + $0x24] sm:$0xf]
      %v903 = vld [vmem:[#allocation2 + $0x28] sm:$0xf]
      %v904 = vld [vmem:[#allocation2 + $0x2c] sm:$0xf]
      %v905 = vld [vmem:[%s2] sm:$0xf]
      %v906 = vld [vmem:[%s2 + $0x4] sm:$0xf]
      %v907 = vld [vmem:[%s2 + $0x8] sm:$0xf]
      %v908 = vld [vmem:[%s2 + $0xc] sm:$0xf]
      %v909 = vld [vmem:[%s2 + $0x10] sm:$0xf]
      %v910 = vld [vmem:[%s2 + $0x14] sm:$0xf]
      %v911 = vld [vmem:[%s2 + $0x18] sm:$0xf]
      %v912 = vld [vmem:[%s2 + $0x1c] sm:$0xf]
      %v913 = vld [vmem:[%s2 + $0x20] sm:$0xf]
      %v914 = vld [vmem:[%s2 + $0x24] sm:$0xf]
      %v915 = vld [vmem:[%s2 + $0x28] sm:$0xf]
      %v916 = vld [vmem:[%s2 + $0x2c] sm:$0xf]
      %v917 = vld [vmem:[%s2 + $0x30] sm:$0xf]
      %v918 = vld [vmem:[%s2 + $0x34] sm:$0xf]
      %v919 = vld [vmem:[%s2 + $0x38] sm:$0xf]
      %v920 = vld [vmem:[%s2 + $0x3c] sm:$0xf]
      %v921 = vld [vmem:[#allocation2 + $0x30] sm:$0xf]
      %s922 = scalar_lea.vmem %s2, 64
      %v923 = vld [vmem:[%s922] sm:$0xf]
      %v924 = vld [vmem:[%s922 + $0x4] sm:$0xf]
      %v925 = vld [vmem:[%s922 + $0x8] sm:$0xf]
      %v926 = vld [vmem:[%s922 + $0xc] sm:$0xf]
      %v927 = vld [vmem:[%s922 + $0x10] sm:$0xf]
      %v928 = vld [vmem:[%s922 + $0x14] sm:$0xf]
      %v929 = vld [vmem:[%s922 + $0x18] sm:$0xf]
      %v930 = vld [vmem:[%s922 + $0x1c] sm:$0xf]
      %v931 = vld [vmem:[%s922 + $0x20] sm:$0xf]
      %v932 = vld [vmem:[%s922 + $0x24] sm:$0xf]
      %v933 = vld [vmem:[%s922 + $0x28] sm:$0xf]
      %v934 = vld [vmem:[%s922 + $0x2c] sm:$0xf]
      %v935 = vld [vmem:[%s922 + $0x30] sm:$0xf]
      %v936 = vld [vmem:[%s922 + $0x34] sm:$0xf]
      %v937 = vld [vmem:[%s922 + $0x38] sm:$0xf]
      %v938 = vld [vmem:[%s922 + $0x3c] sm:$0xf]
      %v951 = vunpack.c.l.b16 %v894
      %v952 = vunpack.c.l.b16 %v895
      %v953 = vunpack.c.l.b16 %v896
      %v954 = vunpack.c.l.b16 %v897
      %v955 = vunpack.c.l.b16 %v898
      %v956 = vunpack.c.l.b16 %v899
      %v957 = vunpack.c.l.b16 %v900
      %v958 = vunpack.c.l.b16 %v901
      %v959 = vunpack.c.l.b16 %v902
      %v960 = vunpack.c.l.b16 %v903
      %v961 = vunpack.c.l.b16 %v904
      %v962 = vunpack.c.l.b16 %v921
      %v963 = vpack.c.b16 %v952, %v951
      %v964 = vpack.c.b16 %v954, %v953
      %v965 = vpack.c.b16 %v956, %v955
      %v966 = vpack.c.b16 %v958, %v957
      %v967 = vpack.c.b16 %v960, %v959
      %v968 = vpack.c.b16 %v962, %v961
      %v991 = vunpack.c.l.b16 %v923
      %v992 = vunpack.c.l.b16 %v924
      %v993 = vunpack.c.l.b16 %v925
      %v994 = vunpack.c.l.b16 %v926
      %v995 = vunpack.c.l.b16 %v927
      %v996 = vunpack.c.l.b16 %v928
      %v997 = vunpack.c.l.b16 %v929
      %v998 = vunpack.c.l.b16 %v930
      %v999 = vunpack.c.l.b16 %v931
      %v1000 = vunpack.c.l.b16 %v932
      %v1001 = vunpack.c.l.b16 %v933
      %v1002 = vunpack.c.l.b16 %v934
      %v1003 = vunpack.c.l.b16 %v935
      %v1004 = vunpack.c.l.b16 %v936
      %v1005 = vunpack.c.l.b16 %v937
      %v1006 = vunpack.c.l.b16 %v938
      %v1007 = vpack.c.b16 %v992, %v991
      %v1008 = vpack.c.b16 %v994, %v993
      %v1009 = vpack.c.b16 %v996, %v995
      %v1010 = vpack.c.b16 %v998, %v997
      %v1011 = vpack.c.b16 %v1000, %v999
      %v1012 = vpack.c.b16 %v1002, %v1001
      %v1013 = vpack.c.b16 %v1004, %v1003
      %v1014 = vpack.c.b16 %v1006, %v1005
      %1023 = vmatpush.bf16.msra.mxu0 %v1014
      %1024 = vmatpush.bf16.msra.mxu0 %v1013
      %1025 = vmatpush.bf16.msra.mxu0 %v1012
      %1026 = vmatpush.bf16.msra.mxu0 %v1011
      %1027 = vmatpush.bf16.msra.mxu0 %v1010
      %1028 = vmatpush.bf16.msra.mxu0 %v1009
      %1029 = vmatpush.bf16.msra.mxu0 %v1008
      %1030 = vmatpush.bf16.msra.mxu0 %v1007
      %1031 = vmatmul.bf16.gmra.mxu0 %v963
      %v1032 = vpop.f32.mrf.mxu0
      %v1033 = vadd.f32 0.0, %v1032
      %v1034 = vpop.f32.mrf.mxu0
      %v1035 = vadd.f32 0.0, %v1034
      %1036 = vmatmul.bf16.gmra.mxu0 %v964
      %v1037 = vpop.f32.mrf.mxu0
      %v1038 = vadd.f32 0.0, %v1037
      %v1039 = vpop.f32.mrf.mxu0
      %v1040 = vadd.f32 0.0, %v1039
      %1041 = vmatmul.bf16.gmra.mxu0 %v965
      %v1042 = vpop.f32.mrf.mxu0
      %v1043 = vadd.f32 0.0, %v1042
      %v1044 = vpop.f32.mrf.mxu0
      %v1045 = vadd.f32 0.0, %v1044
      %1046 = vmatmul.bf16.gmra.mxu0 %v966
      %v1047 = vpop.f32.mrf.mxu0
      %v1048 = vadd.f32 0.0, %v1047
      %v1049 = vpop.f32.mrf.mxu0
      %v1050 = vadd.f32 0.0, %v1049
      %1051 = vmatmul.bf16.gmra.mxu0 %v967
      %v1052 = vpop.f32.mrf.mxu0
      %v1053 = vadd.f32 0.0, %v1052
      %v1054 = vpop.f32.mrf.mxu0
      %v1055 = vadd.f32 0.0, %v1054
      %1056 = vmatmul.bf16.gmra.mxu0 %v968
      %v1057 = vpop.f32.mrf.mxu0
      %v1058 = vadd.f32 0.0, %v1057
      %v1059 = vpop.f32.mrf.mxu0
      %v1060 = vadd.f32 0.0, %v1059
      %1061 = vdwg.mxu0
      %v1063 = vunpack.c.l.b16 %v893
      %v1064 = vpack.c.b16 %v951, %v1063
      %v1065 = vpack.c.b16 %v953, %v952
      %v1066 = vpack.c.b16 %v955, %v954
      %v1067 = vpack.c.b16 %v957, %v956
      %v1068 = vpack.c.b16 %v959, %v958
      %v1069 = vpack.c.b16 %v961, %v960
      %v1092 = vunpack.c.l.b16 %v905
      %v1093 = vunpack.c.l.b16 %v906
      %v1094 = vunpack.c.l.b16 %v907
      %v1095 = vunpack.c.l.b16 %v908
      %v1096 = vunpack.c.l.b16 %v909
      %v1097 = vunpack.c.l.b16 %v910
      %v1098 = vunpack.c.l.b16 %v911
      %v1099 = vunpack.c.l.b16 %v912
      %v1100 = vunpack.c.l.b16 %v913
      %v1101 = vunpack.c.l.b16 %v914
      %v1102 = vunpack.c.l.b16 %v915
      %v1103 = vunpack.c.l.b16 %v916
      %v1104 = vunpack.c.l.b16 %v917
      %v1105 = vunpack.c.l.b16 %v918
      %v1106 = vunpack.c.l.b16 %v919
      %v1107 = vunpack.c.l.b16 %v920
      %v1108 = vpack.c.b16 %v1093, %v1092
      %v1109 = vpack.c.b16 %v1095, %v1094
      %v1110 = vpack.c.b16 %v1097, %v1096
      %v1111 = vpack.c.b16 %v1099, %v1098
      %v1112 = vpack.c.b16 %v1101, %v1100
      %v1113 = vpack.c.b16 %v1103, %v1102
      %v1114 = vpack.c.b16 %v1105, %v1104
      %v1115 = vpack.c.b16 %v1107, %v1106
      %1124 = vmatpush.bf16.msra.mxu0 %v1115
      %1125 = vmatpush.bf16.msra.mxu0 %v1114
      %1126 = vmatpush.bf16.msra.mxu0 %v1113
      %1127 = vmatpush.bf16.msra.mxu0 %v1112
      %1128 = vmatpush.bf16.msra.mxu0 %v1111
      %1129 = vmatpush.bf16.msra.mxu0 %v1110
      %1130 = vmatpush.bf16.msra.mxu0 %v1109
      %1131 = vmatpush.bf16.msra.mxu0 %v1108
      %1132 = vmatmul.bf16.gmra.mxu0 %v1064
      %v1133 = vpop.f32.mrf.mxu0
      %v1134 = vadd.f32 %v1033, %v1133
      %v1135 = vpop.f32.mrf.mxu0
      %v1136 = vadd.f32 %v1035, %v1135
      %1137 = vmatmul.bf16.gmra.mxu0 %v1065
      %v1138 = vpop.f32.mrf.mxu0
      %v1139 = vadd.f32 %v1038, %v1138
      %v1140 = vpop.f32.mrf.mxu0
      %v1141 = vadd.f32 %v1040, %v1140
      %1142 = vmatmul.bf16.gmra.mxu0 %v1066
      %v1143 = vpop.f32.mrf.mxu0
      %v1144 = vadd.f32 %v1043, %v1143
      %v1145 = vpop.f32.mrf.mxu0
      %v1146 = vadd.f32 %v1045, %v1145
      %1147 = vmatmul.bf16.gmra.mxu0 %v1067
      %v1148 = vpop.f32.mrf.mxu0
      %v1149 = vadd.f32 %v1048, %v1148
      %v1150 = vpop.f32.mrf.mxu0
      %v1151 = vadd.f32 %v1050, %v1150
      %1152 = vmatmul.bf16.gmra.mxu0 %v1068
      %v1153 = vpop.f32.mrf.mxu0
      %v1154 = vadd.f32 %v1053, %v1153
      %v1155 = vpop.f32.mrf.mxu0
      %v1156 = vadd.f32 %v1055, %v1155
      %1157 = vmatmul.bf16.gmra.mxu0 %v1069
      %v1158 = vpop.f32.mrf.mxu0
      %v1159 = vadd.f32 %v1058, %v1158
      %v1160 = vpop.f32.mrf.mxu0
      %v1161 = vadd.f32 %v1060, %v1160
      %1162 = vdwg.mxu0
      %v1163 = vld [vmem:[#allocation2 + $0x8] sm:$0xf]
      %v1164 = vld [vmem:[#allocation2 + $0xc] sm:$0xf]
      %v1165 = vld [vmem:[#allocation2 + $0x10] sm:$0xf]
      %v1166 = vld [vmem:[#allocation2 + $0x14] sm:$0xf]
      %v1167 = vld [vmem:[#allocation2 + $0x18] sm:$0xf]
      %v1168 = vld [vmem:[#allocation2 + $0x1c] sm:$0xf]
      %v1169 = vld [vmem:[#allocation2 + $0x20] sm:$0xf]
      %v1170 = vld [vmem:[#allocation2 + $0x24] sm:$0xf]
      %v1171 = vld [vmem:[#allocation2 + $0x28] sm:$0xf]
      %v1172 = vld [vmem:[#allocation2 + $0x2c] sm:$0xf]
      %v1173 = vld [vmem:[#allocation2 + $0x30] sm:$0xf]
      %v1174 = vld [vmem:[#allocation2 + $0x34] sm:$0xf]
      %s1175 = scalar_lea.vmem %s2, 128
      %v1176 = vld [vmem:[%s1175] sm:$0xf]
      %v1177 = vld [vmem:[%s1175 + $0x4] sm:$0xf]
      %v1178 = vld [vmem:[%s1175 + $0x8] sm:$0xf]
      %v1179 = vld [vmem:[%s1175 + $0xc] sm:$0xf]
      %v1180 = vld [vmem:[%s1175 + $0x10] sm:$0xf]
      %v1181 = vld [vmem:[%s1175 + $0x14] sm:$0xf]
      %v1182 = vld [vmem:[%s1175 + $0x18] sm:$0xf]
      %v1183 = vld [vmem:[%s1175 + $0x1c] sm:$0xf]
      %v1184 = vld [vmem:[%s1175 + $0x20] sm:$0xf]
      %v1185 = vld [vmem:[%s1175 + $0x24] sm:$0xf]
      %v1186 = vld [vmem:[%s1175 + $0x28] sm:$0xf]
      %v1187 = vld [vmem:[%s1175 + $0x2c] sm:$0xf]
      %v1188 = vld [vmem:[%s1175 + $0x30] sm:$0xf]
      %v1189 = vld [vmem:[%s1175 + $0x34] sm:$0xf]
      %v1190 = vld [vmem:[%s1175 + $0x38] sm:$0xf]
      %v1191 = vld [vmem:[%s1175 + $0x3c] sm:$0xf]
      %v1204 = vunpack.c.l.b16 %v1163
      %v1205 = vunpack.c.l.b16 %v1164
      %v1206 = vunpack.c.l.b16 %v1165
      %v1207 = vunpack.c.l.b16 %v1166
      %v1208 = vunpack.c.l.b16 %v1167
      %v1209 = vunpack.c.l.b16 %v1168
      %v1210 = vunpack.c.l.b16 %v1169
      %v1211 = vunpack.c.l.b16 %v1170
      %v1212 = vunpack.c.l.b16 %v1171
      %v1213 = vunpack.c.l.b16 %v1172
      %v1214 = vunpack.c.l.b16 %v1173
      %v1215 = vunpack.c.l.b16 %v1174
      %v1216 = vpack.c.b16 %v1205, %v1204
      %v1217 = vpack.c.b16 %v1207, %v1206
      %v1218 = vpack.c.b16 %v1209, %v1208
      %v1219 = vpack.c.b16 %v1211, %v1210
      %v1220 = vpack.c.b16 %v1213, %v1212
      %v1221 = vpack.c.b16 %v1215, %v1214
      %v1244 = vunpack.c.l.b16 %v1176
      %v1245 = vunpack.c.l.b16 %v1177
      %v1246 = vunpack.c.l.b16 %v1178
      %v1247 = vunpack.c.l.b16 %v1179
      %v1248 = vunpack.c.l.b16 %v1180
      %v1249 = vunpack.c.l.b16 %v1181
      %v1250 = vunpack.c.l.b16 %v1182
      %v1251 = vunpack.c.l.b16 %v1183
      %v1252 = vunpack.c.l.b16 %v1184
      %v1253 = vunpack.c.l.b16 %v1185
      %v1254 = vunpack.c.l.b16 %v1186
      %v1255 = vunpack.c.l.b16 %v1187
      %v1256 = vunpack.c.l.b16 %v1188
      %v1257 = vunpack.c.l.b16 %v1189
      %v1258 = vunpack.c.l.b16 %v1190
      %v1259 = vunpack.c.l.b16 %v1191
      %v1260 = vpack.c.b16 %v1245, %v1244
      %v1261 = vpack.c.b16 %v1247, %v1246
      %v1262 = vpack.c.b16 %v1249, %v1248
      %v1263 = vpack.c.b16 %v1251, %v1250
      %v1264 = vpack.c.b16 %v1253, %v1252
      %v1265 = vpack.c.b16 %v1255, %v1254
      %v1266 = vpack.c.b16 %v1257, %v1256
      %v1267 = vpack.c.b16 %v1259, %v1258
      %1276 = vmatpush.bf16.msra.mxu0 %v1267
      %1277 = vmatpush.bf16.msra.mxu0 %v1266
      %1278 = vmatpush.bf16.msra.mxu0 %v1265
      %1279 = vmatpush.bf16.msra.mxu0 %v1264
      %1280 = vmatpush.bf16.msra.mxu0 %v1263
      %1281 = vmatpush.bf16.msra.mxu0 %v1262
      %1282 = vmatpush.bf16.msra.mxu0 %v1261
      %1283 = vmatpush.bf16.msra.mxu0 %v1260
      %1284 = vmatmul.bf16.gmra.mxu0 %v1216
      %v1285 = vpop.f32.mrf.mxu0
      %v1286 = vadd.f32 0.0, %v1285
      %v1287 = vpop.f32.mrf.mxu0
      %v1288 = vadd.f32 0.0, %v1287
      %1289 = vmatmul.bf16.gmra.mxu0 %v1217
      %v1290 = vpop.f32.mrf.mxu0
      %v1291 = vadd.f32 0.0, %v1290
      %v1292 = vpop.f32.mrf.mxu0
      %v1293 = vadd.f32 0.0, %v1292
      %1294 = vmatmul.bf16.gmra.mxu0 %v1218
      %v1295 = vpop.f32.mrf.mxu0
      %v1296 = vadd.f32 0.0, %v1295
      %v1297 = vpop.f32.mrf.mxu0
      %v1298 = vadd.f32 0.0, %v1297
      %1299 = vmatmul.bf16.gmra.mxu0 %v1219
      %v1300 = vpop.f32.mrf.mxu0
      %v1301 = vadd.f32 0.0, %v1300
      %v1302 = vpop.f32.mrf.mxu0
      %v1303 = vadd.f32 0.0, %v1302
      %1304 = vmatmul.bf16.gmra.mxu0 %v1220
      %v1305 = vpop.f32.mrf.mxu0
      %v1306 = vadd.f32 0.0, %v1305
      %v1307 = vpop.f32.mrf.mxu0
      %v1308 = vadd.f32 0.0, %v1307
      %1309 = vmatmul.bf16.gmra.mxu0 %v1221
      %v1310 = vpop.f32.mrf.mxu0
      %v1311 = vadd.f32 0.0, %v1310
      %v1312 = vpop.f32.mrf.mxu0
      %v1313 = vadd.f32 0.0, %v1312
      %1314 = vdwg.mxu0
      %v1315 = vadd.f32 %v1134, %v1286
      %v1316 = vadd.f32 %v1136, %v1288
      %v1317 = vadd.f32 %v1139, %v1291
      %v1318 = vadd.f32 %v1141, %v1293
      %v1319 = vadd.f32 %v1144, %v1296
      %v1320 = vadd.f32 %v1146, %v1298
      %v1321 = vadd.f32 %v1149, %v1301
      %v1322 = vadd.f32 %v1151, %v1303
      %v1323 = vadd.f32 %v1154, %v1306
      %v1324 = vadd.f32 %v1156, %v1308
      %v1325 = vadd.f32 %v1159, %v1311
      %v1326 = vadd.f32 %v1161, %v1313
      %v1327 = vperm.slane %v890, 0
      %v1328 = vadd.f32 %v1315, %v1327
      %v1329 = vadd.f32 %v1316, %v1327
      %v1330 = vadd.f32 %v1317, %v1327
      %v1331 = vadd.f32 %v1318, %v1327
      %v1332 = vadd.f32 %v1319, %v1327
      %v1333 = vadd.f32 %v1320, %v1327
      %v1334 = vadd.f32 %v1321, %v1327
      %v1335 = vadd.f32 %v1322, %v1327
      %v1336 = vadd.f32 %v1323, %v1327
      %v1337 = vadd.f32 %v1324, %v1327
      %v1338 = vadd.f32 %v1325, %v1327
      %v1339 = vadd.f32 %v1326, %v1327
      %v1340 = vmax.f32 %v1328, 0.0
      %v1341 = vmax.f32 %v1329, 0.0
      %v1342 = vmax.f32 %v1330, 0.0
      %v1343 = vmax.f32 %v1331, 0.0
      %v1344 = vmax.f32 %v1332, 0.0
      %v1345 = vmax.f32 %v1333, 0.0
      %v1346 = vmax.f32 %v1334, 0.0
      %v1347 = vmax.f32 %v1335, 0.0
      %v1348 = vmax.f32 %v1336, 0.0
      %v1349 = vmax.f32 %v1337, 0.0
      %v1350 = vmax.f32 %v1338, 0.0
      %v1351 = vmax.f32 %v1339, 0.0
      %v1352 = vperm.slane %v891, 0
      %v1353 = vmul.f32 %v1340, %v1352
      %v1354 = vmul.f32 %v1341, %v1352
      %v1355 = vmul.f32 %v1342, %v1352
      %v1356 = vmul.f32 %v1343, %v1352
      %v1357 = vmul.f32 %v1344, %v1352
      %v1358 = vmul.f32 %v1345, %v1352
      %v1359 = vmul.f32 %v1346, %v1352
      %v1360 = vmul.f32 %v1347, %v1352
      %v1361 = vmul.f32 %v1348, %v1352
      %v1362 = vmul.f32 %v1349, %v1352
      %v1363 = vmul.f32 %v1350, %v1352
      %v1364 = vmul.f32 %v1351, %v1352
      %v1365 = vperm.slane %v892, 0
      %v1366 = vadd.f32 %v1353, %v1365
      %v1367 = vadd.f32 %v1354, %v1365
      %v1368 = vadd.f32 %v1355, %v1365
      %v1369 = vadd.f32 %v1356, %v1365
      %v1370 = vadd.f32 %v1357, %v1365
      %v1371 = vadd.f32 %v1358, %v1365
      %v1372 = vadd.f32 %v1359, %v1365
      %v1373 = vadd.f32 %v1360, %v1365
      %v1374 = vadd.f32 %v1361, %v1365
      %v1375 = vadd.f32 %v1362, %v1365
      %v1376 = vadd.f32 %v1363, %v1365
      %v1377 = vadd.f32 %v1364, %v1365
      %v1378 = vpack.c.bf16 %v1366, %v1366
      %v1379 = vpack.c.bf16 %v1367, %v1367
      %v1380 = vpack.c.bf16 %v1368, %v1368
      %v1381 = vpack.c.bf16 %v1369, %v1369
      %v1382 = vpack.c.bf16 %v1370, %v1370
      %v1383 = vpack.c.bf16 %v1371, %v1371
      %v1384 = vpack.c.bf16 %v1372, %v1372
      %v1385 = vpack.c.bf16 %v1373, %v1373
      %v1386 = vpack.c.bf16 %v1374, %v1374
      %v1387 = vpack.c.bf16 %v1375, %v1375
      %v1388 = vpack.c.bf16 %v1376, %v1376
      %v1389 = vpack.c.bf16 %v1377, %v1377
      %1390 = vst [vmem:[#allocation3] sm:$0xf] %v1378
      %1391 = vst [vmem:[#allocation3 + $0x4] sm:$0xf] %v1379
      %1392 = vst [vmem:[#allocation3 + $0x8] sm:$0xf] %v1380
      %1393 = vst [vmem:[#allocation3 + $0xc] sm:$0xf] %v1381
      %1394 = vst [vmem:[#allocation3 + $0x10] sm:$0xf] %v1382
      %1395 = vst [vmem:[#allocation3 + $0x14] sm:$0xf] %v1383
      %1396 = vst [vmem:[#allocation3 + $0x18] sm:$0xf] %v1384
      %1397 = vst [vmem:[#allocation3 + $0x1c] sm:$0xf] %v1385
      %1398 = vst [vmem:[#allocation3 + $0x20] sm:$0xf] %v1386
      %1399 = vst [vmem:[#allocation3 + $0x24] sm:$0xf] %v1387
      %1400 = vst [vmem:[#allocation3 + $0x28] sm:$0xf] %v1388
      %1401 = vst [vmem:[#allocation3 + $0x2c] sm:$0xf] %v1389
      %v1402 = vld [vmem:[%s8 + $0x6] sm:$0x1]
      %v1403 = vld [vmem:[%s8 + $0x7] sm:$0x1]
      %v1404 = vld [vmem:[%s8 + $0x8] sm:$0x1]
      %v1405 = vld [vmem:[#allocation3] sm:$0xf]
      %v1406 = vld [vmem:[#allocation3 + $0x4] sm:$0xf]
      %v1407 = vld [vmem:[#allocation3 + $0x8] sm:$0xf]
      %v1408 = vld [vmem:[#allocation3 + $0xc] sm:$0xf]
      %v1409 = vld [vmem:[#allocation3 + $0x10] sm:$0xf]
      %v1410 = vld [vmem:[#allocation3 + $0x14] sm:$0xf]
      %v1411 = vld [vmem:[#allocation3 + $0x18] sm:$0xf]
      %v1412 = vld [vmem:[#allocation3 + $0x1c] sm:$0xf]
      %v1413 = vld [vmem:[#allocation3 + $0x20] sm:$0xf]
      %v1414 = vld [vmem:[#allocation3 + $0x24] sm:$0xf]
      %v1415 = vld [vmem:[%s3] sm:$0xf]
      %v1416 = vld [vmem:[%s3 + $0x4] sm:$0xf]
      %v1417 = vld [vmem:[%s3 + $0x8] sm:$0xf]
      %v1418 = vld [vmem:[%s3 + $0xc] sm:$0xf]
      %v1419 = vld [vmem:[%s3 + $0x10] sm:$0xf]
      %v1420 = vld [vmem:[%s3 + $0x14] sm:$0xf]
      %v1421 = vld [vmem:[%s3 + $0x18] sm:$0xf]
      %v1422 = vld [vmem:[%s3 + $0x1c] sm:$0xf]
      %v1423 = vld [vmem:[%s3 + $0x20] sm:$0xf]
      %v1424 = vld [vmem:[%s3 + $0x24] sm:$0xf]
      %v1425 = vld [vmem:[%s3 + $0x28] sm:$0xf]
      %v1426 = vld [vmem:[%s3 + $0x2c] sm:$0xf]
      %v1427 = vld [vmem:[%s3 + $0x30] sm:$0xf]
      %v1428 = vld [vmem:[%s3 + $0x34] sm:$0xf]
      %v1429 = vld [vmem:[%s3 + $0x38] sm:$0xf]
      %v1430 = vld [vmem:[%s3 + $0x3c] sm:$0xf]
      %v1431 = vld [vmem:[#allocation3 + $0x28] sm:$0xf]
      %s1432 = scalar_lea.vmem %s3, 64
      %v1433 = vld [vmem:[%s1432] sm:$0xf]
      %v1434 = vld [vmem:[%s1432 + $0x4] sm:$0xf]
      %v1435 = vld [vmem:[%s1432 + $0x8] sm:$0xf]
      %v1436 = vld [vmem:[%s1432 + $0xc] sm:$0xf]
      %v1437 = vld [vmem:[%s1432 + $0x10] sm:$0xf]
      %v1438 = vld [vmem:[%s1432 + $0x14] sm:$0xf]
      %v1439 = vld [vmem:[%s1432 + $0x18] sm:$0xf]
      %v1440 = vld [vmem:[%s1432 + $0x1c] sm:$0xf]
      %v1441 = vld [vmem:[%s1432 + $0x20] sm:$0xf]
      %v1442 = vld [vmem:[%s1432 + $0x24] sm:$0xf]
      %v1443 = vld [vmem:[%s1432 + $0x28] sm:$0xf]
      %v1444 = vld [vmem:[%s1432 + $0x2c] sm:$0xf]
      %v1445 = vld [vmem:[%s1432 + $0x30] sm:$0xf]
      %v1446 = vld [vmem:[%s1432 + $0x34] sm:$0xf]
      %v1447 = vld [vmem:[%s1432 + $0x38] sm:$0xf]
      %v1448 = vld [vmem:[%s1432 + $0x3c] sm:$0xf]
      %v1459 = vunpack.c.l.b16 %v1406
      %v1460 = vunpack.c.l.b16 %v1407
      %v1461 = vunpack.c.l.b16 %v1408
      %v1462 = vunpack.c.l.b16 %v1409
      %v1463 = vunpack.c.l.b16 %v1410
      %v1464 = vunpack.c.l.b16 %v1411
      %v1465 = vunpack.c.l.b16 %v1412
      %v1466 = vunpack.c.l.b16 %v1413
      %v1467 = vunpack.c.l.b16 %v1414
      %v1468 = vunpack.c.l.b16 %v1431
      %v1469 = vpack.c.b16 %v1460, %v1459
      %v1470 = vpack.c.b16 %v1462, %v1461
      %v1471 = vpack.c.b16 %v1464, %v1463
      %v1472 = vpack.c.b16 %v1466, %v1465
      %v1473 = vpack.c.b16 %v1468, %v1467
      %v1495 = vunpack.c.l.b16 %v1433
      %v1496 = vunpack.c.l.b16 %v1434
      %v1497 = vunpack.c.l.b16 %v1435
      %v1498 = vunpack.c.l.b16 %v1436
      %v1499 = vunpack.c.l.b16 %v1437
      %v1500 = vunpack.c.l.b16 %v1438
      %v1501 = vunpack.c.l.b16 %v1439
      %v1502 = vunpack.c.l.b16 %v1440
      %v1503 = vunpack.c.l.b16 %v1441
      %v1504 = vunpack.c.l.b16 %v1442
      %v1505 = vunpack.c.l.b16 %v1443
      %v1506 = vunpack.c.l.b16 %v1444
      %v1507 = vunpack.c.l.b16 %v1445
      %v1508 = vunpack.c.l.b16 %v1446
      %v1509 = vunpack.c.l.b16 %v1447
      %v1510 = vunpack.c.l.b16 %v1448
      %v1511 = vpack.c.b16 %v1496, %v1495
      %v1512 = vpack.c.b16 %v1498, %v1497
      %v1513 = vpack.c.b16 %v1500, %v1499
      %v1514 = vpack.c.b16 %v1502, %v1501
      %v1515 = vpack.c.b16 %v1504, %v1503
      %v1516 = vpack.c.b16 %v1506, %v1505
      %v1517 = vpack.c.b16 %v1508, %v1507
      %v1518 = vpack.c.b16 %v1510, %v1509
      %1527 = vmatpush.bf16.msra.mxu0 %v1518
      %1528 = vmatpush.bf16.msra.mxu0 %v1517
      %1529 = vmatpush.bf16.msra.mxu0 %v1516
      %1530 = vmatpush.bf16.msra.mxu0 %v1515
      %1531 = vmatpush.bf16.msra.mxu0 %v1514
      %1532 = vmatpush.bf16.msra.mxu0 %v1513
      %1533 = vmatpush.bf16.msra.mxu0 %v1512
      %1534 = vmatpush.bf16.msra.mxu0 %v1511
      %1535 = vmatmul.bf16.gmra.mxu0 %v1469
      %v1536 = vpop.f32.mrf.mxu0
      %v1537 = vadd.f32 0.0, %v1536
      %v1538 = vpop.f32.mrf.mxu0
      %v1539 = vadd.f32 0.0, %v1538
      %1540 = vmatmul.bf16.gmra.mxu0 %v1470
      %v1541 = vpop.f32.mrf.mxu0
      %v1542 = vadd.f32 0.0, %v1541
      %v1543 = vpop.f32.mrf.mxu0
      %v1544 = vadd.f32 0.0, %v1543
      %1545 = vmatmul.bf16.gmra.mxu0 %v1471
      %v1546 = vpop.f32.mrf.mxu0
      %v1547 = vadd.f32 0.0, %v1546
      %v1548 = vpop.f32.mrf.mxu0
      %v1549 = vadd.f32 0.0, %v1548
      %1550 = vmatmul.bf16.gmra.mxu0 %v1472
      %v1551 = vpop.f32.mrf.mxu0
      %v1552 = vadd.f32 0.0, %v1551
      %v1553 = vpop.f32.mrf.mxu0
      %v1554 = vadd.f32 0.0, %v1553
      %1555 = vmatmul.bf16.gmra.mxu0 %v1473
      %v1556 = vpop.f32.mrf.mxu0
      %v1557 = vadd.f32 0.0, %v1556
      %v1558 = vpop.f32.mrf.mxu0
      %v1559 = vadd.f32 0.0, %v1558
      %1560 = vdwg.mxu0
      %v1562 = vunpack.c.l.b16 %v1405
      %v1563 = vpack.c.b16 %v1459, %v1562
      %v1564 = vpack.c.b16 %v1461, %v1460
      %v1565 = vpack.c.b16 %v1463, %v1462
      %v1566 = vpack.c.b16 %v1465, %v1464
      %v1567 = vpack.c.b16 %v1467, %v1466
      %v1589 = vunpack.c.l.b16 %v1415
      %v1590 = vunpack.c.l.b16 %v1416
      %v1591 = vunpack.c.l.b16 %v1417
      %v1592 = vunpack.c.l.b16 %v1418
      %v1593 = vunpack.c.l.b16 %v1419
      %v1594 = vunpack.c.l.b16 %v1420
      %v1595 = vunpack.c.l.b16 %v1421
      %v1596 = vunpack.c.l.b16 %v1422
      %v1597 = vunpack.c.l.b16 %v1423
      %v1598 = vunpack.c.l.b16 %v1424
      %v1599 = vunpack.c.l.b16 %v1425
      %v1600 = vunpack.c.l.b16 %v1426
      %v1601 = vunpack.c.l.b16 %v1427
      %v1602 = vunpack.c.l.b16 %v1428
      %v1603 = vunpack.c.l.b16 %v1429
      %v1604 = vunpack.c.l.b16 %v1430
      %v1605 = vpack.c.b16 %v1590, %v1589
      %v1606 = vpack.c.b16 %v1592, %v1591
      %v1607 = vpack.c.b16 %v1594, %v1593
      %v1608 = vpack.c.b16 %v1596, %v1595
      %v1609 = vpack.c.b16 %v1598, %v1597
      %v1610 = vpack.c.b16 %v1600, %v1599
      %v1611 = vpack.c.b16 %v1602, %v1601
      %v1612 = vpack.c.b16 %v1604, %v1603
      %1621 = vmatpush.bf16.msra.mxu0 %v1612
      %1622 = vmatpush.bf16.msra.mxu0 %v1611
      %1623 = vmatpush.bf16.msra.mxu0 %v1610
      %1624 = vmatpush.bf16.msra.mxu0 %v1609
      %1625 = vmatpush.bf16.msra.mxu0 %v1608
      %1626 = vmatpush.bf16.msra.mxu0 %v1607
      %1627 = vmatpush.bf16.msra.mxu0 %v1606
      %1628 = vmatpush.bf16.msra.mxu0 %v1605
      %1629 = vmatmul.bf16.gmra.mxu0 %v1563
      %v1630 = vpop.f32.mrf.mxu0
      %v1631 = vadd.f32 %v1537, %v1630
      %v1632 = vpop.f32.mrf.mxu0
      %v1633 = vadd.f32 %v1539, %v1632
      %1634 = vmatmul.bf16.gmra.mxu0 %v1564
      %v1635 = vpop.f32.mrf.mxu0
      %v1636 = vadd.f32 %v1542, %v1635
      %v1637 = vpop.f32.mrf.mxu0
      %v1638 = vadd.f32 %v1544, %v1637
      %1639 = vmatmul.bf16.gmra.mxu0 %v1565
      %v1640 = vpop.f32.mrf.mxu0
      %v1641 = vadd.f32 %v1547, %v1640
      %v1642 = vpop.f32.mrf.mxu0
      %v1643 = vadd.f32 %v1549, %v1642
      %1644 = vmatmul.bf16.gmra.mxu0 %v1566
      %v1645 = vpop.f32.mrf.mxu0
      %v1646 = vadd.f32 %v1552, %v1645
      %v1647 = vpop.f32.mrf.mxu0
      %v1648 = vadd.f32 %v1554, %v1647
      %1649 = vmatmul.bf16.gmra.mxu0 %v1567
      %v1650 = vpop.f32.mrf.mxu0
      %v1651 = vadd.f32 %v1557, %v1650
      %v1652 = vpop.f32.mrf.mxu0
      %v1653 = vadd.f32 %v1559, %v1652
      %1654 = vdwg.mxu0
      %v1655 = vld [vmem:[#allocation3 + $0x8] sm:$0xf]
      %v1656 = vld [vmem:[#allocation3 + $0xc] sm:$0xf]
      %v1657 = vld [vmem:[#allocation3 + $0x10] sm:$0xf]
      %v1658 = vld [vmem:[#allocation3 + $0x14] sm:$0xf]
      %v1659 = vld [vmem:[#allocation3 + $0x18] sm:$0xf]
      %v1660 = vld [vmem:[#allocation3 + $0x1c] sm:$0xf]
      %v1661 = vld [vmem:[#allocation3 + $0x20] sm:$0xf]
      %v1662 = vld [vmem:[#allocation3 + $0x24] sm:$0xf]
      %v1663 = vld [vmem:[#allocation3 + $0x28] sm:$0xf]
      %v1664 = vld [vmem:[#allocation3 + $0x2c] sm:$0xf]
      %s1665 = scalar_lea.vmem %s3, 128
      %v1666 = vld [vmem:[%s1665] sm:$0xf]
      %v1667 = vld [vmem:[%s1665 + $0x4] sm:$0xf]
      %v1668 = vld [vmem:[%s1665 + $0x8] sm:$0xf]
      %v1669 = vld [vmem:[%s1665 + $0xc] sm:$0xf]
      %v1670 = vld [vmem:[%s1665 + $0x10] sm:$0xf]
      %v1671 = vld [vmem:[%s1665 + $0x14] sm:$0xf]
      %v1672 = vld [vmem:[%s1665 + $0x18] sm:$0xf]
      %v1673 = vld [vmem:[%s1665 + $0x1c] sm:$0xf]
      %v1674 = vld [vmem:[%s1665 + $0x20] sm:$0xf]
      %v1675 = vld [vmem:[%s1665 + $0x24] sm:$0xf]
      %v1676 = vld [vmem:[%s1665 + $0x28] sm:$0xf]
      %v1677 = vld [vmem:[%s1665 + $0x2c] sm:$0xf]
      %v1678 = vld [vmem:[%s1665 + $0x30] sm:$0xf]
      %v1679 = vld [vmem:[%s1665 + $0x34] sm:$0xf]
      %v1680 = vld [vmem:[%s1665 + $0x38] sm:$0xf]
      %v1681 = vld [vmem:[%s1665 + $0x3c] sm:$0xf]
      %v1692 = vunpack.c.l.b16 %v1655
      %v1693 = vunpack.c.l.b16 %v1656
      %v1694 = vunpack.c.l.b16 %v1657
      %v1695 = vunpack.c.l.b16 %v1658
      %v1696 = vunpack.c.l.b16 %v1659
      %v1697 = vunpack.c.l.b16 %v1660
      %v1698 = vunpack.c.l.b16 %v1661
      %v1699 = vunpack.c.l.b16 %v1662
      %v1700 = vunpack.c.l.b16 %v1663
      %v1701 = vunpack.c.l.b16 %v1664
      %v1702 = vpack.c.b16 %v1693, %v1692
      %v1703 = vpack.c.b16 %v1695, %v1694
      %v1704 = vpack.c.b16 %v1697, %v1696
      %v1705 = vpack.c.b16 %v1699, %v1698
      %v1706 = vpack.c.b16 %v1701, %v1700
      %v1728 = vunpack.c.l.b16 %v1666
      %v1729 = vunpack.c.l.b16 %v1667
      %v1730 = vunpack.c.l.b16 %v1668
      %v1731 = vunpack.c.l.b16 %v1669
      %v1732 = vunpack.c.l.b16 %v1670
      %v1733 = vunpack.c.l.b16 %v1671
      %v1734 = vunpack.c.l.b16 %v1672
      %v1735 = vunpack.c.l.b16 %v1673
      %v1736 = vunpack.c.l.b16 %v1674
      %v1737 = vunpack.c.l.b16 %v1675
      %v1738 = vunpack.c.l.b16 %v1676
      %v1739 = vunpack.c.l.b16 %v1677
      %v1740 = vunpack.c.l.b16 %v1678
      %v1741 = vunpack.c.l.b16 %v1679
      %v1742 = vunpack.c.l.b16 %v1680
      %v1743 = vunpack.c.l.b16 %v1681
      %v1744 = vpack.c.b16 %v1729, %v1728
      %v1745 = vpack.c.b16 %v1731, %v1730
      %v1746 = vpack.c.b16 %v1733, %v1732
      %v1747 = vpack.c.b16 %v1735, %v1734
      %v1748 = vpack.c.b16 %v1737, %v1736
      %v1749 = vpack.c.b16 %v1739, %v1738
      %v1750 = vpack.c.b16 %v1741, %v1740
      %v1751 = vpack.c.b16 %v1743, %v1742
      %1760 = vmatpush.bf16.msra.mxu0 %v1751
      %1761 = vmatpush.bf16.msra.mxu0 %v1750
      %1762 = vmatpush.bf16.msra.mxu0 %v1749
      %1763 = vmatpush.bf16.msra.mxu0 %v1748
      %1764 = vmatpush.bf16.msra.mxu0 %v1747
      %1765 = vmatpush.bf16.msra.mxu0 %v1746
      %1766 = vmatpush.bf16.msra.mxu0 %v1745
      %1767 = vmatpush.bf16.msra.mxu0 %v1744
      %1768 = vmatmul.bf16.gmra.mxu0 %v1702
      %v1769 = vpop.f32.mrf.mxu0
      %v1770 = vadd.f32 0.0, %v1769
      %v1771 = vpop.f32.mrf.mxu0
      %v1772 = vadd.f32 0.0, %v1771
      %1773 = vmatmul.bf16.gmra.mxu0 %v1703
      %v1774 = vpop.f32.mrf.mxu0
      %v1775 = vadd.f32 0.0, %v1774
      %v1776 = vpop.f32.mrf.mxu0
      %v1777 = vadd.f32 0.0, %v1776
      %1778 = vmatmul.bf16.gmra.mxu0 %v1704
      %v1779 = vpop.f32.mrf.mxu0
      %v1780 = vadd.f32 0.0, %v1779
      %v1781 = vpop.f32.mrf.mxu0
      %v1782 = vadd.f32 0.0, %v1781
      %1783 = vmatmul.bf16.gmra.mxu0 %v1705
      %v1784 = vpop.f32.mrf.mxu0
      %v1785 = vadd.f32 0.0, %v1784
      %v1786 = vpop.f32.mrf.mxu0
      %v1787 = vadd.f32 0.0, %v1786
      %1788 = vmatmul.bf16.gmra.mxu0 %v1706
      %v1789 = vpop.f32.mrf.mxu0
      %v1790 = vadd.f32 0.0, %v1789
      %v1791 = vpop.f32.mrf.mxu0
      %v1792 = vadd.f32 0.0, %v1791
      %1793 = vdwg.mxu0
      %v1794 = vadd.f32 %v1631, %v1770
      %v1795 = vadd.f32 %v1633, %v1772
      %v1796 = vadd.f32 %v1636, %v1775
      %v1797 = vadd.f32 %v1638, %v1777
      %v1798 = vadd.f32 %v1641, %v1780
      %v1799 = vadd.f32 %v1643, %v1782
      %v1800 = vadd.f32 %v1646, %v1785
      %v1801 = vadd.f32 %v1648, %v1787
      %v1802 = vadd.f32 %v1651, %v1790
      %v1803 = vadd.f32 %v1653, %v1792
      %v1804 = vperm.slane %v1402, 0
      %v1805 = vadd.f32 %v1794, %v1804
      %v1806 = vadd.f32 %v1795, %v1804
      %v1807 = vadd.f32 %v1796, %v1804
      %v1808 = vadd.f32 %v1797, %v1804
      %v1809 = vadd.f32 %v1798, %v1804
      %v1810 = vadd.f32 %v1799, %v1804
      %v1811 = vadd.f32 %v1800, %v1804
      %v1812 = vadd.f32 %v1801, %v1804
      %v1813 = vadd.f32 %v1802, %v1804
      %v1814 = vadd.f32 %v1803, %v1804
      %v1815 = vmax.f32 %v1805, 0.0
      %v1816 = vmax.f32 %v1806, 0.0
      %v1817 = vmax.f32 %v1807, 0.0
      %v1818 = vmax.f32 %v1808, 0.0
      %v1819 = vmax.f32 %v1809, 0.0
      %v1820 = vmax.f32 %v1810, 0.0
      %v1821 = vmax.f32 %v1811, 0.0
      %v1822 = vmax.f32 %v1812, 0.0
      %v1823 = vmax.f32 %v1813, 0.0
      %v1824 = vmax.f32 %v1814, 0.0
      %v1825 = vperm.slane %v1403, 0
      %v1826 = vmul.f32 %v1815, %v1825
      %v1827 = vmul.f32 %v1816, %v1825
      %v1828 = vmul.f32 %v1817, %v1825
      %v1829 = vmul.f32 %v1818, %v1825
      %v1830 = vmul.f32 %v1819, %v1825
      %v1831 = vmul.f32 %v1820, %v1825
      %v1832 = vmul.f32 %v1821, %v1825
      %v1833 = vmul.f32 %v1822, %v1825
      %v1834 = vmul.f32 %v1823, %v1825
      %v1835 = vmul.f32 %v1824, %v1825
      %v1836 = vperm.slane %v1404, 0
      %v1837 = vadd.f32 %v1826, %v1836
      %v1838 = vadd.f32 %v1827, %v1836
      %v1839 = vadd.f32 %v1828, %v1836
      %v1840 = vadd.f32 %v1829, %v1836
      %v1841 = vadd.f32 %v1830, %v1836
      %v1842 = vadd.f32 %v1831, %v1836
      %v1843 = vadd.f32 %v1832, %v1836
      %v1844 = vadd.f32 %v1833, %v1836
      %v1845 = vadd.f32 %v1834, %v1836
      %v1846 = vadd.f32 %v1835, %v1836
      %v1847 = vpack.c.bf16 %v1837, %v1837
      %v1848 = vpack.c.bf16 %v1838, %v1838
      %v1849 = vpack.c.bf16 %v1839, %v1839
      %v1850 = vpack.c.bf16 %v1840, %v1840
      %v1851 = vpack.c.bf16 %v1841, %v1841
      %v1852 = vpack.c.bf16 %v1842, %v1842
      %v1853 = vpack.c.bf16 %v1843, %v1843
      %v1854 = vpack.c.bf16 %v1844, %v1844
      %v1855 = vpack.c.bf16 %v1845, %v1845
      %v1856 = vpack.c.bf16 %v1846, %v1846
      %1857 = vst [vmem:[#allocation2] sm:$0xf] %v1847
      %1858 = vst [vmem:[#allocation2 + $0x4] sm:$0xf] %v1848
      %1859 = vst [vmem:[#allocation2 + $0x8] sm:$0xf] %v1849
      %1860 = vst [vmem:[#allocation2 + $0xc] sm:$0xf] %v1850
      %1861 = vst [vmem:[#allocation2 + $0x10] sm:$0xf] %v1851
      %1862 = vst [vmem:[#allocation2 + $0x14] sm:$0xf] %v1852
      %1863 = vst [vmem:[#allocation2 + $0x18] sm:$0xf] %v1853
      %1864 = vst [vmem:[#allocation2 + $0x1c] sm:$0xf] %v1854
      %1865 = vst [vmem:[#allocation2 + $0x20] sm:$0xf] %v1855
      %1866 = vst [vmem:[#allocation2 + $0x24] sm:$0xf] %v1856
      %v1867 = vld [vmem:[#allocation2] sm:$0xf]
      %v1868 = vld [vmem:[%s4] sm:$0xf]
      %v1869 = vld [vmem:[%s4 + $0x4] sm:$0xf]
      %v1870 = vld [vmem:[%s4 + $0x8] sm:$0xf]
      %v1871 = vld [vmem:[%s4 + $0xc] sm:$0xf]
      %v1872 = vld [vmem:[%s4 + $0x10] sm:$0xf]
      %v1873 = vld [vmem:[%s4 + $0x14] sm:$0xf]
      %v1874 = vld [vmem:[%s4 + $0x18] sm:$0xf]
      %v1875 = vld [vmem:[%s4 + $0x1c] sm:$0xf]
      %v1876 = vld [vmem:[%s4 + $0x20] sm:$0xf]
      %v1877 = vld [vmem:[%s4 + $0x24] sm:$0xf]
      %v1878 = vld [vmem:[%s4 + $0x28] sm:$0xf]
      %v1879 = vld [vmem:[%s4 + $0x2c] sm:$0xf]
      %v1880 = vld [vmem:[%s4 + $0x30] sm:$0xf]
      %v1881 = vld [vmem:[%s4 + $0x34] sm:$0xf]
      %v1882 = vld [vmem:[%s4 + $0x38] sm:$0xf]
      %v1883 = vld [vmem:[%s4 + $0x3c] sm:$0xf]
      %v1884 = vld [vmem:[#allocation2 + $0x4] sm:$0xf]
      %s1885 = scalar_lea.vmem %s4, 64
      %v1886 = vld [vmem:[%s1885] sm:$0xf]
      %v1887 = vld [vmem:[%s1885 + $0x4] sm:$0xf]
      %v1888 = vld [vmem:[%s1885 + $0x8] sm:$0xf]
      %v1889 = vld [vmem:[%s1885 + $0xc] sm:$0xf]
      %v1890 = vld [vmem:[%s1885 + $0x10] sm:$0xf]
      %v1891 = vld [vmem:[%s1885 + $0x14] sm:$0xf]
      %v1892 = vld [vmem:[%s1885 + $0x18] sm:$0xf]
      %v1893 = vld [vmem:[%s1885 + $0x1c] sm:$0xf]
      %v1894 = vld [vmem:[%s1885 + $0x20] sm:$0xf]
      %v1895 = vld [vmem:[%s1885 + $0x24] sm:$0xf]
      %v1896 = vld [vmem:[%s1885 + $0x28] sm:$0xf]
      %v1897 = vld [vmem:[%s1885 + $0x2c] sm:$0xf]
      %v1898 = vld [vmem:[%s1885 + $0x30] sm:$0xf]
      %v1899 = vld [vmem:[%s1885 + $0x34] sm:$0xf]
      %v1900 = vld [vmem:[%s1885 + $0x38] sm:$0xf]
      %v1901 = vld [vmem:[%s1885 + $0x3c] sm:$0xf]
      %v1918 = vunpack.c.l.b16 %v1886
      %v1919 = vunpack.c.l.b16 %v1887
      %v1920 = vunpack.c.l.b16 %v1888
      %v1921 = vunpack.c.l.b16 %v1889
      %v1922 = vunpack.c.l.b16 %v1890
      %v1923 = vunpack.c.l.b16 %v1891
      %v1924 = vunpack.c.l.b16 %v1892
      %v1925 = vunpack.c.l.b16 %v1893
      %v1926 = vunpack.c.l.b16 %v1894
      %v1927 = vunpack.c.l.b16 %v1895
      %v1928 = vunpack.c.l.b16 %v1896
      %v1929 = vunpack.c.l.b16 %v1897
      %v1930 = vunpack.c.l.b16 %v1898
      %v1931 = vunpack.c.l.b16 %v1899
      %v1932 = vunpack.c.l.b16 %v1900
      %v1933 = vunpack.c.l.b16 %v1901
      %v1934 = vpack.c.b16 %v1919, %v1918
      %v1935 = vpack.c.b16 %v1921, %v1920
      %v1936 = vpack.c.b16 %v1923, %v1922
      %v1937 = vpack.c.b16 %v1925, %v1924
      %v1938 = vpack.c.b16 %v1927, %v1926
      %v1939 = vpack.c.b16 %v1929, %v1928
      %v1940 = vpack.c.b16 %v1931, %v1930
      %v1941 = vpack.c.b16 %v1933, %v1932
      %1950 = vmatpush.bf16.msra.mxu0 %v1941
      %1951 = vmatpush.bf16.msra.mxu0 %v1940
      %1952 = vmatpush.bf16.msra.mxu0 %v1939
      %1953 = vmatpush.bf16.msra.mxu0 %v1938
      %1954 = vmatpush.bf16.msra.mxu0 %v1937
      %1955 = vmatpush.bf16.msra.mxu0 %v1936
      %1956 = vmatpush.bf16.msra.mxu0 %v1935
      %1957 = vmatpush.bf16.msra.mxu0 %v1934
      %1958 = vmatmul.bf16.gmra.mxu0 %v1884
      %v1959 = vpop.f32.mrf.mxu0
      %v1960 = vadd.f32 0.0, %v1959
      %v1961 = vpop.f32.mrf.mxu0
      %1962 = vdwg.mxu0
      %v1979 = vunpack.c.l.b16 %v1868
      %v1980 = vunpack.c.l.b16 %v1869
      %v1981 = vunpack.c.l.b16 %v1870
      %v1982 = vunpack.c.l.b16 %v1871
      %v1983 = vunpack.c.l.b16 %v1872
      %v1984 = vunpack.c.l.b16 %v1873
      %v1985 = vunpack.c.l.b16 %v1874
      %v1986 = vunpack.c.l.b16 %v1875
      %v1987 = vunpack.c.l.b16 %v1876
      %v1988 = vunpack.c.l.b16 %v1877
      %v1989 = vunpack.c.l.b16 %v1878
      %v1990 = vunpack.c.l.b16 %v1879
      %v1991 = vunpack.c.l.b16 %v1880
      %v1992 = vunpack.c.l.b16 %v1881
      %v1993 = vunpack.c.l.b16 %v1882
      %v1994 = vunpack.c.l.b16 %v1883
      %v1995 = vpack.c.b16 %v1980, %v1979
      %v1996 = vpack.c.b16 %v1982, %v1981
      %v1997 = vpack.c.b16 %v1984, %v1983
      %v1998 = vpack.c.b16 %v1986, %v1985
      %v1999 = vpack.c.b16 %v1988, %v1987
      %v2000 = vpack.c.b16 %v1990, %v1989
      %v2001 = vpack.c.b16 %v1992, %v1991
      %v2002 = vpack.c.b16 %v1994, %v1993
      %2011 = vmatpush.bf16.msra.mxu0 %v2002
      %2012 = vmatpush.bf16.msra.mxu0 %v2001
      %2013 = vmatpush.bf16.msra.mxu0 %v2000
      %2014 = vmatpush.bf16.msra.mxu0 %v1999
      %2015 = vmatpush.bf16.msra.mxu0 %v1998
      %2016 = vmatpush.bf16.msra.mxu0 %v1997
      %2017 = vmatpush.bf16.msra.mxu0 %v1996
      %2018 = vmatpush.bf16.msra.mxu0 %v1995
      %2019 = vmatmul.bf16.gmra.mxu0 %v1867
      %v2020 = vpop.f32.mrf.mxu0
      %v2021 = vadd.f32 %v1960, %v2020
      %v2022 = vpop.f32.mrf.mxu0
      %2023 = vdwg.mxu0
      %v2024 = vld [vmem:[#allocation2 + $0x8] sm:$0xf]
      %s2025 = scalar_lea.vmem %s4, 128
      %v2026 = vld [vmem:[%s2025] sm:$0xf]
      %v2027 = vld [vmem:[%s2025 + $0x4] sm:$0xf]
      %v2028 = vld [vmem:[%s2025 + $0x8] sm:$0xf]
      %v2029 = vld [vmem:[%s2025 + $0xc] sm:$0xf]
      %v2030 = vld [vmem:[%s2025 + $0x10] sm:$0xf]
      %v2031 = vld [vmem:[%s2025 + $0x14] sm:$0xf]
      %v2032 = vld [vmem:[%s2025 + $0x18] sm:$0xf]
      %v2033 = vld [vmem:[%s2025 + $0x1c] sm:$0xf]
      %v2034 = vld [vmem:[%s2025 + $0x20] sm:$0xf]
      %v2035 = vld [vmem:[%s2025 + $0x24] sm:$0xf]
      %v2036 = vld [vmem:[%s2025 + $0x28] sm:$0xf]
      %v2037 = vld [vmem:[%s2025 + $0x2c] sm:$0xf]
      %v2038 = vld [vmem:[%s2025 + $0x30] sm:$0xf]
      %v2039 = vld [vmem:[%s2025 + $0x34] sm:$0xf]
      %v2040 = vld [vmem:[%s2025 + $0x38] sm:$0xf]
      %v2041 = vld [vmem:[%s2025 + $0x3c] sm:$0xf]
      %v2058 = vunpack.c.l.b16 %v2026
      %v2059 = vunpack.c.l.b16 %v2027
      %v2060 = vunpack.c.l.b16 %v2028
      %v2061 = vunpack.c.l.b16 %v2029
      %v2062 = vunpack.c.l.b16 %v2030
      %v2063 = vunpack.c.l.b16 %v2031
      %v2064 = vunpack.c.l.b16 %v2032
      %v2065 = vunpack.c.l.b16 %v2033
      %v2066 = vunpack.c.l.b16 %v2034
      %v2067 = vunpack.c.l.b16 %v2035
      %v2068 = vunpack.c.l.b16 %v2036
      %v2069 = vunpack.c.l.b16 %v2037
      %v2070 = vunpack.c.l.b16 %v2038
      %v2071 = vunpack.c.l.b16 %v2039
      %v2072 = vunpack.c.l.b16 %v2040
      %v2073 = vunpack.c.l.b16 %v2041
      %v2074 = vpack.c.b16 %v2059, %v2058
      %v2075 = vpack.c.b16 %v2061, %v2060
      %v2076 = vpack.c.b16 %v2063, %v2062
      %v2077 = vpack.c.b16 %v2065, %v2064
      %v2078 = vpack.c.b16 %v2067, %v2066
      %v2079 = vpack.c.b16 %v2069, %v2068
      %v2080 = vpack.c.b16 %v2071, %v2070
      %v2081 = vpack.c.b16 %v2073, %v2072
      %2090 = vmatpush.bf16.msra.mxu0 %v2081
      %2091 = vmatpush.bf16.msra.mxu0 %v2080
      %2092 = vmatpush.bf16.msra.mxu0 %v2079
      %2093 = vmatpush.bf16.msra.mxu0 %v2078
      %2094 = vmatpush.bf16.msra.mxu0 %v2077
      %2095 = vmatpush.bf16.msra.mxu0 %v2076
      %2096 = vmatpush.bf16.msra.mxu0 %v2075
      %2097 = vmatpush.bf16.msra.mxu0 %v2074
      %2098 = vmatmul.bf16.gmra.mxu0 %v2024
      %v2099 = vpop.f32.mrf.mxu0
      %v2100 = vadd.f32 0.0, %v2099
      %v2101 = vpop.f32.mrf.mxu0
      %2102 = vdwg.mxu0
      %v2103 = vadd.f32 %v2021, %v2100
      %v2104 = vld [vmem:[#allocation2 + $0xc] sm:$0xf]
      %s2105 = scalar_lea.vmem %s4, 192
      %v2106 = vld [vmem:[%s2105] sm:$0xf]
      %v2107 = vld [vmem:[%s2105 + $0x4] sm:$0xf]
      %v2108 = vld [vmem:[%s2105 + $0x8] sm:$0xf]
      %v2109 = vld [vmem:[%s2105 + $0xc] sm:$0xf]
      %v2110 = vld [vmem:[%s2105 + $0x10] sm:$0xf]
      %v2111 = vld [vmem:[%s2105 + $0x14] sm:$0xf]
      %v2112 = vld [vmem:[%s2105 + $0x18] sm:$0xf]
      %v2113 = vld [vmem:[%s2105 + $0x1c] sm:$0xf]
      %v2114 = vld [vmem:[%s2105 + $0x20] sm:$0xf]
      %v2115 = vld [vmem:[%s2105 + $0x24] sm:$0xf]
      %v2116 = vld [vmem:[%s2105 + $0x28] sm:$0xf]
      %v2117 = vld [vmem:[%s2105 + $0x2c] sm:$0xf]
      %v2118 = vld [vmem:[%s2105 + $0x30] sm:$0xf]
      %v2119 = vld [vmem:[%s2105 + $0x34] sm:$0xf]
      %v2120 = vld [vmem:[%s2105 + $0x38] sm:$0xf]
      %v2121 = vld [vmem:[%s2105 + $0x3c] sm:$0xf]
      %v2138 = vunpack.c.l.b16 %v2106
      %v2139 = vunpack.c.l.b16 %v2107
      %v2140 = vunpack.c.l.b16 %v2108
      %v2141 = vunpack.c.l.b16 %v2109
      %v2142 = vunpack.c.l.b16 %v2110
      %v2143 = vunpack.c.l.b16 %v2111
      %v2144 = vunpack.c.l.b16 %v2112
      %v2145 = vunpack.c.l.b16 %v2113
      %v2146 = vunpack.c.l.b16 %v2114
      %v2147 = vunpack.c.l.b16 %v2115
      %v2148 = vunpack.c.l.b16 %v2116
      %v2149 = vunpack.c.l.b16 %v2117
      %v2150 = vunpack.c.l.b16 %v2118
      %v2151 = vunpack.c.l.b16 %v2119
      %v2152 = vunpack.c.l.b16 %v2120
      %v2153 = vunpack.c.l.b16 %v2121
      %v2154 = vpack.c.b16 %v2139, %v2138
      %v2155 = vpack.c.b16 %v2141, %v2140
      %v2156 = vpack.c.b16 %v2143, %v2142
      %v2157 = vpack.c.b16 %v2145, %v2144
      %v2158 = vpack.c.b16 %v2147, %v2146
      %v2159 = vpack.c.b16 %v2149, %v2148
      %v2160 = vpack.c.b16 %v2151, %v2150
      %v2161 = vpack.c.b16 %v2153, %v2152
      %2170 = vmatpush.bf16.msra.mxu0 %v2161
      %2171 = vmatpush.bf16.msra.mxu0 %v2160
      %2172 = vmatpush.bf16.msra.mxu0 %v2159
      %2173 = vmatpush.bf16.msra.mxu0 %v2158
      %2174 = vmatpush.bf16.msra.mxu0 %v2157
      %2175 = vmatpush.bf16.msra.mxu0 %v2156
      %2176 = vmatpush.bf16.msra.mxu0 %v2155
      %2177 = vmatpush.bf16.msra.mxu0 %v2154
      %2178 = vmatmul.bf16.gmra.mxu0 %v2104
      %v2179 = vpop.f32.mrf.mxu0
      %v2180 = vadd.f32 0.0, %v2179
      %v2181 = vpop.f32.mrf.mxu0
      %2182 = vdwg.mxu0
      %v2183 = vadd.f32 %v2103, %v2180
      %v2184 = vld [vmem:[#allocation2 + $0x10] sm:$0xf]
      %s2185 = scalar_lea.vmem %s4, 256
      %v2186 = vld [vmem:[%s2185] sm:$0xf]
      %v2187 = vld [vmem:[%s2185 + $0x4] sm:$0xf]
      %v2188 = vld [vmem:[%s2185 + $0x8] sm:$0xf]
      %v2189 = vld [vmem:[%s2185 + $0xc] sm:$0xf]
      %v2190 = vld [vmem:[%s2185 + $0x10] sm:$0xf]
      %v2191 = vld [vmem:[%s2185 + $0x14] sm:$0xf]
      %v2192 = vld [vmem:[%s2185 + $0x18] sm:$0xf]
      %v2193 = vld [vmem:[%s2185 + $0x1c] sm:$0xf]
      %v2194 = vld [vmem:[%s2185 + $0x20] sm:$0xf]
      %v2195 = vld [vmem:[%s2185 + $0x24] sm:$0xf]
      %v2196 = vld [vmem:[%s2185 + $0x28] sm:$0xf]
      %v2197 = vld [vmem:[%s2185 + $0x2c] sm:$0xf]
      %v2198 = vld [vmem:[%s2185 + $0x30] sm:$0xf]
      %v2199 = vld [vmem:[%s2185 + $0x34] sm:$0xf]
      %v2200 = vld [vmem:[%s2185 + $0x38] sm:$0xf]
      %v2201 = vld [vmem:[%s2185 + $0x3c] sm:$0xf]
      %v2218 = vunpack.c.l.b16 %v2186
      %v2219 = vunpack.c.l.b16 %v2187
      %v2220 = vunpack.c.l.b16 %v2188
      %v2221 = vunpack.c.l.b16 %v2189
      %v2222 = vunpack.c.l.b16 %v2190
      %v2223 = vunpack.c.l.b16 %v2191
      %v2224 = vunpack.c.l.b16 %v2192
      %v2225 = vunpack.c.l.b16 %v2193
      %v2226 = vunpack.c.l.b16 %v2194
      %v2227 = vunpack.c.l.b16 %v2195
      %v2228 = vunpack.c.l.b16 %v2196
      %v2229 = vunpack.c.l.b16 %v2197
      %v2230 = vunpack.c.l.b16 %v2198
      %v2231 = vunpack.c.l.b16 %v2199
      %v2232 = vunpack.c.l.b16 %v2200
      %v2233 = vunpack.c.l.b16 %v2201
      %v2234 = vpack.c.b16 %v2219, %v2218
      %v2235 = vpack.c.b16 %v2221, %v2220
      %v2236 = vpack.c.b16 %v2223, %v2222
      %v2237 = vpack.c.b16 %v2225, %v2224
      %v2238 = vpack.c.b16 %v2227, %v2226
      %v2239 = vpack.c.b16 %v2229, %v2228
      %v2240 = vpack.c.b16 %v2231, %v2230
      %v2241 = vpack.c.b16 %v2233, %v2232
      %2250 = vmatpush.bf16.msra.mxu0 %v2241
      %2251 = vmatpush.bf16.msra.mxu0 %v2240
      %2252 = vmatpush.bf16.msra.mxu0 %v2239
      %2253 = vmatpush.bf16.msra.mxu0 %v2238
      %2254 = vmatpush.bf16.msra.mxu0 %v2237
      %2255 = vmatpush.bf16.msra.mxu0 %v2236
      %2256 = vmatpush.bf16.msra.mxu0 %v2235
      %2257 = vmatpush.bf16.msra.mxu0 %v2234
      %2258 = vmatmul.bf16.gmra.mxu0 %v2184
      %v2259 = vpop.f32.mrf.mxu0
      %v2260 = vadd.f32 0.0, %v2259
      %v2261 = vpop.f32.mrf.mxu0
      %2262 = vdwg.mxu0
      %v2263 = vadd.f32 %v2183, %v2260
      %v2264 = vld [vmem:[#allocation2 + $0x14] sm:$0xf]
      %s2265 = scalar_lea.vmem %s4, 320
      %v2266 = vld [vmem:[%s2265] sm:$0xf]
      %v2267 = vld [vmem:[%s2265 + $0x4] sm:$0xf]
      %v2268 = vld [vmem:[%s2265 + $0x8] sm:$0xf]
      %v2269 = vld [vmem:[%s2265 + $0xc] sm:$0xf]
      %v2270 = vld [vmem:[%s2265 + $0x10] sm:$0xf]
      %v2271 = vld [vmem:[%s2265 + $0x14] sm:$0xf]
      %v2272 = vld [vmem:[%s2265 + $0x18] sm:$0xf]
      %v2273 = vld [vmem:[%s2265 + $0x1c] sm:$0xf]
      %v2274 = vld [vmem:[%s2265 + $0x20] sm:$0xf]
      %v2275 = vld [vmem:[%s2265 + $0x24] sm:$0xf]
      %v2276 = vld [vmem:[%s2265 + $0x28] sm:$0xf]
      %v2277 = vld [vmem:[%s2265 + $0x2c] sm:$0xf]
      %v2278 = vld [vmem:[%s2265 + $0x30] sm:$0xf]
      %v2279 = vld [vmem:[%s2265 + $0x34] sm:$0xf]
      %v2280 = vld [vmem:[%s2265 + $0x38] sm:$0xf]
      %v2281 = vld [vmem:[%s2265 + $0x3c] sm:$0xf]
      %v2298 = vunpack.c.l.b16 %v2266
      %v2299 = vunpack.c.l.b16 %v2267
      %v2300 = vunpack.c.l.b16 %v2268
      %v2301 = vunpack.c.l.b16 %v2269
      %v2302 = vunpack.c.l.b16 %v2270
      %v2303 = vunpack.c.l.b16 %v2271
      %v2304 = vunpack.c.l.b16 %v2272
      %v2305 = vunpack.c.l.b16 %v2273
      %v2306 = vunpack.c.l.b16 %v2274
      %v2307 = vunpack.c.l.b16 %v2275
      %v2308 = vunpack.c.l.b16 %v2276
      %v2309 = vunpack.c.l.b16 %v2277
      %v2310 = vunpack.c.l.b16 %v2278
      %v2311 = vunpack.c.l.b16 %v2279
      %v2312 = vunpack.c.l.b16 %v2280
      %v2313 = vunpack.c.l.b16 %v2281
      %v2314 = vpack.c.b16 %v2299, %v2298
      %v2315 = vpack.c.b16 %v2301, %v2300
      %v2316 = vpack.c.b16 %v2303, %v2302
      %v2317 = vpack.c.b16 %v2305, %v2304
      %v2318 = vpack.c.b16 %v2307, %v2306
      %v2319 = vpack.c.b16 %v2309, %v2308
      %v2320 = vpack.c.b16 %v2311, %v2310
      %v2321 = vpack.c.b16 %v2313, %v2312
      %2330 = vmatpush.bf16.msra.mxu0 %v2321
      %2331 = vmatpush.bf16.msra.mxu0 %v2320
      %2332 = vmatpush.bf16.msra.mxu0 %v2319
      %2333 = vmatpush.bf16.msra.mxu0 %v2318
      %2334 = vmatpush.bf16.msra.mxu0 %v2317
      %2335 = vmatpush.bf16.msra.mxu0 %v2316
      %2336 = vmatpush.bf16.msra.mxu0 %v2315
      %2337 = vmatpush.bf16.msra.mxu0 %v2314
      %2338 = vmatmul.bf16.gmra.mxu0 %v2264
      %v2339 = vpop.f32.mrf.mxu0
      %v2340 = vadd.f32 0.0, %v2339
      %v2341 = vpop.f32.mrf.mxu0
      %2342 = vdwg.mxu0
      %v2343 = vadd.f32 %v2263, %v2340
      %v2344 = vld [vmem:[#allocation2 + $0x18] sm:$0xf]
      %s2345 = scalar_lea.vmem %s4, 384
      %v2346 = vld [vmem:[%s2345] sm:$0xf]
      %v2347 = vld [vmem:[%s2345 + $0x4] sm:$0xf]
      %v2348 = vld [vmem:[%s2345 + $0x8] sm:$0xf]
      %v2349 = vld [vmem:[%s2345 + $0xc] sm:$0xf]
      %v2350 = vld [vmem:[%s2345 + $0x10] sm:$0xf]
      %v2351 = vld [vmem:[%s2345 + $0x14] sm:$0xf]
      %v2352 = vld [vmem:[%s2345 + $0x18] sm:$0xf]
      %v2353 = vld [vmem:[%s2345 + $0x1c] sm:$0xf]
      %v2354 = vld [vmem:[%s2345 + $0x20] sm:$0xf]
      %v2355 = vld [vmem:[%s2345 + $0x24] sm:$0xf]
      %v2356 = vld [vmem:[%s2345 + $0x28] sm:$0xf]
      %v2357 = vld [vmem:[%s2345 + $0x2c] sm:$0xf]
      %v2358 = vld [vmem:[%s2345 + $0x30] sm:$0xf]
      %v2359 = vld [vmem:[%s2345 + $0x34] sm:$0xf]
      %v2360 = vld [vmem:[%s2345 + $0x38] sm:$0xf]
      %v2361 = vld [vmem:[%s2345 + $0x3c] sm:$0xf]
      %v2378 = vunpack.c.l.b16 %v2346
      %v2379 = vunpack.c.l.b16 %v2347
      %v2380 = vunpack.c.l.b16 %v2348
      %v2381 = vunpack.c.l.b16 %v2349
      %v2382 = vunpack.c.l.b16 %v2350
      %v2383 = vunpack.c.l.b16 %v2351
      %v2384 = vunpack.c.l.b16 %v2352
      %v2385 = vunpack.c.l.b16 %v2353
      %v2386 = vunpack.c.l.b16 %v2354
      %v2387 = vunpack.c.l.b16 %v2355
      %v2388 = vunpack.c.l.b16 %v2356
      %v2389 = vunpack.c.l.b16 %v2357
      %v2390 = vunpack.c.l.b16 %v2358
      %v2391 = vunpack.c.l.b16 %v2359
      %v2392 = vunpack.c.l.b16 %v2360
      %v2393 = vunpack.c.l.b16 %v2361
      %v2394 = vpack.c.b16 %v2379, %v2378
      %v2395 = vpack.c.b16 %v2381, %v2380
      %v2396 = vpack.c.b16 %v2383, %v2382
      %v2397 = vpack.c.b16 %v2385, %v2384
      %v2398 = vpack.c.b16 %v2387, %v2386
      %v2399 = vpack.c.b16 %v2389, %v2388
      %v2400 = vpack.c.b16 %v2391, %v2390
      %v2401 = vpack.c.b16 %v2393, %v2392
      %2410 = vmatpush.bf16.msra.mxu0 %v2401
      %2411 = vmatpush.bf16.msra.mxu0 %v2400
      %2412 = vmatpush.bf16.msra.mxu0 %v2399
      %2413 = vmatpush.bf16.msra.mxu0 %v2398
      %2414 = vmatpush.bf16.msra.mxu0 %v2397
      %2415 = vmatpush.bf16.msra.mxu0 %v2396
      %2416 = vmatpush.bf16.msra.mxu0 %v2395
      %2417 = vmatpush.bf16.msra.mxu0 %v2394
      %2418 = vmatmul.bf16.gmra.mxu0 %v2344
      %v2419 = vpop.f32.mrf.mxu0
      %v2420 = vadd.f32 0.0, %v2419
      %v2421 = vpop.f32.mrf.mxu0
      %2422 = vdwg.mxu0
      %v2423 = vadd.f32 %v2343, %v2420
      %v2424 = vld [vmem:[#allocation2 + $0x1c] sm:$0xf]
      %s2425 = scalar_lea.vmem %s4, 448
      %v2426 = vld [vmem:[%s2425] sm:$0xf]
      %v2427 = vld [vmem:[%s2425 + $0x4] sm:$0xf]
      %v2428 = vld [vmem:[%s2425 + $0x8] sm:$0xf]
      %v2429 = vld [vmem:[%s2425 + $0xc] sm:$0xf]
      %v2430 = vld [vmem:[%s2425 + $0x10] sm:$0xf]
      %v2431 = vld [vmem:[%s2425 + $0x14] sm:$0xf]
      %v2432 = vld [vmem:[%s2425 + $0x18] sm:$0xf]
      %v2433 = vld [vmem:[%s2425 + $0x1c] sm:$0xf]
      %v2434 = vld [vmem:[%s2425 + $0x20] sm:$0xf]
      %v2435 = vld [vmem:[%s2425 + $0x24] sm:$0xf]
      %v2436 = vld [vmem:[%s2425 + $0x28] sm:$0xf]
      %v2437 = vld [vmem:[%s2425 + $0x2c] sm:$0xf]
      %v2438 = vld [vmem:[%s2425 + $0x30] sm:$0xf]
      %v2439 = vld [vmem:[%s2425 + $0x34] sm:$0xf]
      %v2440 = vld [vmem:[%s2425 + $0x38] sm:$0xf]
      %v2441 = vld [vmem:[%s2425 + $0x3c] sm:$0xf]
      %v2458 = vunpack.c.l.b16 %v2426
      %v2459 = vunpack.c.l.b16 %v2427
      %v2460 = vunpack.c.l.b16 %v2428
      %v2461 = vunpack.c.l.b16 %v2429
      %v2462 = vunpack.c.l.b16 %v2430
      %v2463 = vunpack.c.l.b16 %v2431
      %v2464 = vunpack.c.l.b16 %v2432
      %v2465 = vunpack.c.l.b16 %v2433
      %v2466 = vunpack.c.l.b16 %v2434
      %v2467 = vunpack.c.l.b16 %v2435
      %v2468 = vunpack.c.l.b16 %v2436
      %v2469 = vunpack.c.l.b16 %v2437
      %v2470 = vunpack.c.l.b16 %v2438
      %v2471 = vunpack.c.l.b16 %v2439
      %v2472 = vunpack.c.l.b16 %v2440
      %v2473 = vunpack.c.l.b16 %v2441
      %v2474 = vpack.c.b16 %v2459, %v2458
      %v2475 = vpack.c.b16 %v2461, %v2460
      %v2476 = vpack.c.b16 %v2463, %v2462
      %v2477 = vpack.c.b16 %v2465, %v2464
      %v2478 = vpack.c.b16 %v2467, %v2466
      %v2479 = vpack.c.b16 %v2469, %v2468
      %v2480 = vpack.c.b16 %v2471, %v2470
      %v2481 = vpack.c.b16 %v2473, %v2472
      %2490 = vmatpush.bf16.msra.mxu0 %v2481
      %2491 = vmatpush.bf16.msra.mxu0 %v2480
      %2492 = vmatpush.bf16.msra.mxu0 %v2479
      %2493 = vmatpush.bf16.msra.mxu0 %v2478
      %2494 = vmatpush.bf16.msra.mxu0 %v2477
      %2495 = vmatpush.bf16.msra.mxu0 %v2476
      %2496 = vmatpush.bf16.msra.mxu0 %v2475
      %2497 = vmatpush.bf16.msra.mxu0 %v2474
      %2498 = vmatmul.bf16.gmra.mxu0 %v2424
      %v2499 = vpop.f32.mrf.mxu0
      %v2500 = vadd.f32 0.0, %v2499
      %v2501 = vpop.f32.mrf.mxu0
      %2502 = vdwg.mxu0
      %v2503 = vadd.f32 %v2423, %v2500
      %v2504 = vld [vmem:[#allocation2 + $0x20] sm:$0xf]
      %s2505 = scalar_lea.vmem %s4, 512
      %v2506 = vld [vmem:[%s2505] sm:$0xf]
      %v2507 = vld [vmem:[%s2505 + $0x4] sm:$0xf]
      %v2508 = vld [vmem:[%s2505 + $0x8] sm:$0xf]
      %v2509 = vld [vmem:[%s2505 + $0xc] sm:$0xf]
      %v2510 = vld [vmem:[%s2505 + $0x10] sm:$0xf]
      %v2511 = vld [vmem:[%s2505 + $0x14] sm:$0xf]
      %v2512 = vld [vmem:[%s2505 + $0x18] sm:$0xf]
      %v2513 = vld [vmem:[%s2505 + $0x1c] sm:$0xf]
      %v2514 = vld [vmem:[%s2505 + $0x20] sm:$0xf]
      %v2515 = vld [vmem:[%s2505 + $0x24] sm:$0xf]
      %v2516 = vld [vmem:[%s2505 + $0x28] sm:$0xf]
      %v2517 = vld [vmem:[%s2505 + $0x2c] sm:$0xf]
      %v2518 = vld [vmem:[%s2505 + $0x30] sm:$0xf]
      %v2519 = vld [vmem:[%s2505 + $0x34] sm:$0xf]
      %v2520 = vld [vmem:[%s2505 + $0x38] sm:$0xf]
      %v2521 = vld [vmem:[%s2505 + $0x3c] sm:$0xf]
      %v2538 = vunpack.c.l.b16 %v2506
      %v2539 = vunpack.c.l.b16 %v2507
      %v2540 = vunpack.c.l.b16 %v2508
      %v2541 = vunpack.c.l.b16 %v2509
      %v2542 = vunpack.c.l.b16 %v2510
      %v2543 = vunpack.c.l.b16 %v2511
      %v2544 = vunpack.c.l.b16 %v2512
      %v2545 = vunpack.c.l.b16 %v2513
      %v2546 = vunpack.c.l.b16 %v2514
      %v2547 = vunpack.c.l.b16 %v2515
      %v2548 = vunpack.c.l.b16 %v2516
      %v2549 = vunpack.c.l.b16 %v2517
      %v2550 = vunpack.c.l.b16 %v2518
      %v2551 = vunpack.c.l.b16 %v2519
      %v2552 = vunpack.c.l.b16 %v2520
      %v2553 = vunpack.c.l.b16 %v2521
      %v2554 = vpack.c.b16 %v2539, %v2538
      %v2555 = vpack.c.b16 %v2541, %v2540
      %v2556 = vpack.c.b16 %v2543, %v2542
      %v2557 = vpack.c.b16 %v2545, %v2544
      %v2558 = vpack.c.b16 %v2547, %v2546
      %v2559 = vpack.c.b16 %v2549, %v2548
      %v2560 = vpack.c.b16 %v2551, %v2550
      %v2561 = vpack.c.b16 %v2553, %v2552
      %2570 = vmatpush.bf16.msra.mxu0 %v2561
      %2571 = vmatpush.bf16.msra.mxu0 %v2560
      %2572 = vmatpush.bf16.msra.mxu0 %v2559
      %2573 = vmatpush.bf16.msra.mxu0 %v2558
      %2574 = vmatpush.bf16.msra.mxu0 %v2557
      %2575 = vmatpush.bf16.msra.mxu0 %v2556
      %2576 = vmatpush.bf16.msra.mxu0 %v2555
      %2577 = vmatpush.bf16.msra.mxu0 %v2554
      %2578 = vmatmul.bf16.gmra.mxu0 %v2504
      %v2579 = vpop.f32.mrf.mxu0
      %v2580 = vadd.f32 0.0, %v2579
      %v2581 = vpop.f32.mrf.mxu0
      %2582 = vdwg.mxu0
      %v2583 = vadd.f32 %v2503, %v2580
      %v2584 = vld [vmem:[#allocation2 + $0x24] sm:$0xf]
      %s2585 = scalar_lea.vmem %s4, 576
      %v2586 = vld [vmem:[%s2585] sm:$0xf]
      %v2587 = vld [vmem:[%s2585 + $0x4] sm:$0xf]
      %v2588 = vld [vmem:[%s2585 + $0x8] sm:$0xf]
      %v2589 = vld [vmem:[%s2585 + $0xc] sm:$0xf]
      %v2590 = vld [vmem:[%s2585 + $0x10] sm:$0xf]
      %v2591 = vld [vmem:[%s2585 + $0x14] sm:$0xf]
      %v2592 = vld [vmem:[%s2585 + $0x18] sm:$0xf]
      %v2593 = vld [vmem:[%s2585 + $0x1c] sm:$0xf]
      %v2594 = vld [vmem:[%s2585 + $0x20] sm:$0xf]
      %v2595 = vld [vmem:[%s2585 + $0x24] sm:$0xf]
      %v2596 = vld [vmem:[%s2585 + $0x28] sm:$0xf]
      %v2597 = vld [vmem:[%s2585 + $0x2c] sm:$0xf]
      %v2598 = vld [vmem:[%s2585 + $0x30] sm:$0xf]
      %v2599 = vld [vmem:[%s2585 + $0x34] sm:$0xf]
      %v2600 = vld [vmem:[%s2585 + $0x38] sm:$0xf]
      %v2601 = vld [vmem:[%s2585 + $0x3c] sm:$0xf]
      %v2618 = vunpack.c.l.b16 %v2586
      %v2619 = vunpack.c.l.b16 %v2587
      %v2620 = vunpack.c.l.b16 %v2588
      %v2621 = vunpack.c.l.b16 %v2589
      %v2622 = vunpack.c.l.b16 %v2590
      %v2623 = vunpack.c.l.b16 %v2591
      %v2624 = vunpack.c.l.b16 %v2592
      %v2625 = vunpack.c.l.b16 %v2593
      %v2626 = vunpack.c.l.b16 %v2594
      %v2627 = vunpack.c.l.b16 %v2595
      %v2628 = vunpack.c.l.b16 %v2596
      %v2629 = vunpack.c.l.b16 %v2597
      %v2630 = vunpack.c.l.b16 %v2598
      %v2631 = vunpack.c.l.b16 %v2599
      %v2632 = vunpack.c.l.b16 %v2600
      %v2633 = vunpack.c.l.b16 %v2601
      %v2634 = vpack.c.b16 %v2619, %v2618
      %v2635 = vpack.c.b16 %v2621, %v2620
      %v2636 = vpack.c.b16 %v2623, %v2622
      %v2637 = vpack.c.b16 %v2625, %v2624
      %v2638 = vpack.c.b16 %v2627, %v2626
      %v2639 = vpack.c.b16 %v2629, %v2628
      %v2640 = vpack.c.b16 %v2631, %v2630
      %v2641 = vpack.c.b16 %v2633, %v2632
      %2650 = vmatpush.bf16.msra.mxu0 %v2641
      %2651 = vmatpush.bf16.msra.mxu0 %v2640
      %2652 = vmatpush.bf16.msra.mxu0 %v2639
      %2653 = vmatpush.bf16.msra.mxu0 %v2638
      %2654 = vmatpush.bf16.msra.mxu0 %v2637
      %2655 = vmatpush.bf16.msra.mxu0 %v2636
      %2656 = vmatpush.bf16.msra.mxu0 %v2635
      %2657 = vmatpush.bf16.msra.mxu0 %v2634
      %2658 = vmatmul.bf16.gmra.mxu0 %v2584
      %v2659 = vpop.f32.mrf.mxu0
      %v2660 = vadd.f32 0.0, %v2659
      %v2661 = vpop.f32.mrf.mxu0
      %2662 = vdwg.mxu0
      %v2663 = vadd.f32 %v2583, %v2660
      %v2664 = vld [vmem:[%s8 + $0x9] sm:$0x1]
      %v2665 = vperm.slane %v2664, 0
      %v2666 = vadd.f32 %v2663, %v2665
      %v2667 = vmax.f32 %v2666, 0.0
      %v2668 = vpack.c.bf16 %v2667, %v2667
      %v2669 = vld [vmem:[%s5] sm:$0xf]
      %v2670 = vld [vmem:[%s5 + $0x4] sm:$0xf]
      %v2671 = vld [vmem:[%s5 + $0x8] sm:$0xf]
      %v2672 = vld [vmem:[%s5 + $0xc] sm:$0xf]
      %v2673 = vld [vmem:[%s5 + $0x10] sm:$0xf]
      %v2674 = vld [vmem:[%s5 + $0x14] sm:$0xf]
      %v2675 = vld [vmem:[%s5 + $0x18] sm:$0xf]
      %v2676 = vld [vmem:[%s5 + $0x1c] sm:$0xf]
      %v2677 = vld [vmem:[%s5 + $0x20] sm:$0xf]
      %v2678 = vld [vmem:[%s5 + $0x24] sm:$0xf]
      %v2679 = vld [vmem:[%s5 + $0x28] sm:$0xf]
      %v2680 = vld [vmem:[%s5 + $0x2c] sm:$0xf]
      %v2681 = vld [vmem:[%s5 + $0x30] sm:$0xf]
      %v2682 = vld [vmem:[%s5 + $0x34] sm:$0xf]
      %v2683 = vld [vmem:[%s5 + $0x38] sm:$0xf]
      %v2684 = vld [vmem:[%s5 + $0x3c] sm:$0xf]
      %v2685 = vld [vmem:[%s8 + $0xa] sm:$0x1]
      %v2686 = vperm.slane %v2685, 0
      %v2703 = vunpack.c.l.b16 %v2669
      %v2704 = vunpack.c.l.b16 %v2670
      %v2705 = vunpack.c.l.b16 %v2671
      %v2706 = vunpack.c.l.b16 %v2672
      %v2707 = vunpack.c.l.b16 %v2673
      %v2708 = vunpack.c.l.b16 %v2674
      %v2709 = vunpack.c.l.b16 %v2675
      %v2710 = vunpack.c.l.b16 %v2676
      %v2711 = vunpack.c.l.b16 %v2677
      %v2712 = vunpack.c.l.b16 %v2678
      %v2713 = vunpack.c.l.b16 %v2679
      %v2714 = vunpack.c.l.b16 %v2680
      %v2715 = vunpack.c.l.b16 %v2681
      %v2716 = vunpack.c.l.b16 %v2682
      %v2717 = vunpack.c.l.b16 %v2683
      %v2718 = vunpack.c.l.b16 %v2684
      %v2719 = vpack.c.b16 %v2704, %v2703
      %v2720 = vpack.c.b16 %v2706, %v2705
      %v2721 = vpack.c.b16 %v2708, %v2707
      %v2722 = vpack.c.b16 %v2710, %v2709
      %v2723 = vpack.c.b16 %v2712, %v2711
      %v2724 = vpack.c.b16 %v2714, %v2713
      %v2725 = vpack.c.b16 %v2716, %v2715
      %v2726 = vpack.c.b16 %v2718, %v2717
      %2735 = vmatpush.bf16.msra.mxu0 %v2726
      %2736 = vmatpush.bf16.msra.mxu0 %v2725
      %2737 = vmatpush.bf16.msra.mxu0 %v2724
      %2738 = vmatpush.bf16.msra.mxu0 %v2723
      %2739 = vmatpush.bf16.msra.mxu0 %v2722
      %2740 = vmatpush.bf16.msra.mxu0 %v2721
      %2741 = vmatpush.bf16.msra.mxu0 %v2720
      %2742 = vmatpush.bf16.msra.mxu0 %v2719
      %2743 = vmatmul.bf16.gmra.mxu0 %v2668
      %v2744 = vpop.f32.mrf.mxu0
      %v2745 = vadd.f32 %v2686, %v2744
      %v2746 = vpop.f32.mrf.mxu0
      %2747 = vdwg.mxu0
      %v2748 = vmax.f32 %v2745, 0.0
      %v2749 = vpack.c.bf16 %v2748, %v2748
      %v2750 = vld [vmem:[%s6] sm:$0xf]
      %v2751 = vld [vmem:[%s6 + $0x4] sm:$0xf]
      %v2752 = vld [vmem:[%s6 + $0x8] sm:$0xf]
      %v2753 = vld [vmem:[%s6 + $0xc] sm:$0xf]
      %v2754 = vld [vmem:[%s6 + $0x10] sm:$0xf]
      %v2755 = vld [vmem:[%s6 + $0x14] sm:$0xf]
      %v2756 = vld [vmem:[%s6 + $0x18] sm:$0xf]
      %v2757 = vld [vmem:[%s6 + $0x1c] sm:$0xf]
      %v2758 = vld [vmem:[%s6 + $0x20] sm:$0xf]
      %v2759 = vld [vmem:[%s6 + $0x24] sm:$0xf]
      %v2760 = vld [vmem:[%s6 + $0x28] sm:$0xf]
      %v2761 = vld [vmem:[%s6 + $0x2c] sm:$0xf]
      %v2762 = vld [vmem:[%s6 + $0x30] sm:$0xf]
      %v2763 = vld [vmem:[%s6 + $0x34] sm:$0xf]
      %v2764 = vld [vmem:[%s6 + $0x38] sm:$0xf]
      %v2765 = vld [vmem:[%s6 + $0x3c] sm:$0xf]
      %v2766 = vld [vmem:[%s8 + $0xb] sm:$0x1]
      %v2767 = vperm.slane %v2766, 0
      %v2784 = vunpack.c.l.b16 %v2750
      %v2785 = vunpack.c.l.b16 %v2751
      %v2786 = vunpack.c.l.b16 %v2752
      %v2787 = vunpack.c.l.b16 %v2753
      %v2788 = vunpack.c.l.b16 %v2754
      %v2789 = vunpack.c.l.b16 %v2755
      %v2790 = vunpack.c.l.b16 %v2756
      %v2791 = vunpack.c.l.b16 %v2757
      %v2792 = vunpack.c.l.b16 %v2758
      %v2793 = vunpack.c.l.b16 %v2759
      %v2794 = vunpack.c.l.b16 %v2760
      %v2795 = vunpack.c.l.b16 %v2761
      %v2796 = vunpack.c.l.b16 %v2762
      %v2797 = vunpack.c.l.b16 %v2763
      %v2798 = vunpack.c.l.b16 %v2764
      %v2799 = vunpack.c.l.b16 %v2765
      %v2800 = vpack.c.b16 %v2785, %v2784
      %v2801 = vpack.c.b16 %v2787, %v2786
      %v2802 = vpack.c.b16 %v2789, %v2788
      %v2803 = vpack.c.b16 %v2791, %v2790
      %v2804 = vpack.c.b16 %v2793, %v2792
      %v2805 = vpack.c.b16 %v2795, %v2794
      %v2806 = vpack.c.b16 %v2797, %v2796
      %v2807 = vpack.c.b16 %v2799, %v2798
      %2816 = vmatpush.bf16.msra.mxu0 %v2807
      %2817 = vmatpush.bf16.msra.mxu0 %v2806
      %2818 = vmatpush.bf16.msra.mxu0 %v2805
      %2819 = vmatpush.bf16.msra.mxu0 %v2804
      %2820 = vmatpush.bf16.msra.mxu0 %v2803
      %2821 = vmatpush.bf16.msra.mxu0 %v2802
      %2822 = vmatpush.bf16.msra.mxu0 %v2801
      %2823 = vmatpush.bf16.msra.mxu0 %v2800
      %2824 = vmatmul.bf16.gmra.mxu0 %v2749
      %v2825 = vpop.f32.mrf.mxu0
      %v2826 = vadd.f32 %v2767, %v2825
      %v2827 = vpop.f32.mrf.mxu0
      %2828 = vdwg.mxu0
      %v2829 = vmax.f32 %v2826, 0.0
      %v2830 = vpack.c.bf16 %v2829, %v2829
      %v2831 = vld [vmem:[%s7] sm:$0xf]
      %v2832 = vld [vmem:[%s7 + $0x4] sm:$0xf]
      %v2833 = vld [vmem:[%s7 + $0x8] sm:$0xf]
      %v2834 = vld [vmem:[%s7 + $0xc] sm:$0xf]
      %v2835 = vld [vmem:[%s7 + $0x10] sm:$0xf]
      %v2836 = vld [vmem:[%s7 + $0x14] sm:$0xf]
      %v2837 = vld [vmem:[%s7 + $0x18] sm:$0xf]
      %v2838 = vld [vmem:[%s7 + $0x1c] sm:$0xf]
      %v2839 = vld [vmem:[%s7 + $0x20] sm:$0xf]
      %v2840 = vld [vmem:[%s7 + $0x24] sm:$0xf]
      %v2841 = vld [vmem:[%s7 + $0x28] sm:$0xf]
      %v2842 = vld [vmem:[%s7 + $0x2c] sm:$0xf]
      %v2843 = vld [vmem:[%s7 + $0x30] sm:$0xf]
      %v2844 = vld [vmem:[%s7 + $0x34] sm:$0xf]
      %v2845 = vld [vmem:[%s7 + $0x38] sm:$0xf]
      %v2846 = vld [vmem:[%s7 + $0x3c] sm:$0xf]
      %v2847 = vld [vmem:[%s8 + $0xc] sm:$0x1]
      %v2848 = vperm.slane %v2847, 0
      %v2865 = vunpack.c.l.b16 %v2831
      %v2866 = vunpack.c.l.b16 %v2832
      %v2867 = vunpack.c.l.b16 %v2833
      %v2868 = vunpack.c.l.b16 %v2834
      %v2869 = vunpack.c.l.b16 %v2835
      %v2870 = vunpack.c.l.b16 %v2836
      %v2871 = vunpack.c.l.b16 %v2837
      %v2872 = vunpack.c.l.b16 %v2838
      %v2873 = vunpack.c.l.b16 %v2839
      %v2874 = vunpack.c.l.b16 %v2840
      %v2875 = vunpack.c.l.b16 %v2841
      %v2876 = vunpack.c.l.b16 %v2842
      %v2877 = vunpack.c.l.b16 %v2843
      %v2878 = vunpack.c.l.b16 %v2844
      %v2879 = vunpack.c.l.b16 %v2845
      %v2880 = vunpack.c.l.b16 %v2846
      %v2881 = vpack.c.b16 %v2866, %v2865
      %v2882 = vpack.c.b16 %v2868, %v2867
      %v2883 = vpack.c.b16 %v2870, %v2869
      %v2884 = vpack.c.b16 %v2872, %v2871
      %v2885 = vpack.c.b16 %v2874, %v2873
      %v2886 = vpack.c.b16 %v2876, %v2875
      %v2887 = vpack.c.b16 %v2878, %v2877
      %v2888 = vpack.c.b16 %v2880, %v2879
      %2897 = vmatpush.bf16.msra.mxu0 %v2888
      %2898 = vmatpush.bf16.msra.mxu0 %v2887
      %2899 = vmatpush.bf16.msra.mxu0 %v2886
      %2900 = vmatpush.bf16.msra.mxu0 %v2885
      %2901 = vmatpush.bf16.msra.mxu0 %v2884
      %2902 = vmatpush.bf16.msra.mxu0 %v2883
      %2903 = vmatpush.bf16.msra.mxu0 %v2882
      %2904 = vmatpush.bf16.msra.mxu0 %v2881
      %2905 = vmatmul.bf16.gmra.mxu0 %v2830
      %v2906 = vpop.f32.mrf.mxu0
      %v2907 = vadd.f32 %v2848, %v2906
      %v2908 = vpop.f32.mrf.mxu0
      %2909 = vdwg.mxu0
      %2910 = vst [vmem:[%s330] sm:$0xff] %v2907
      %p2911 = scmp.lt.s32.totalorder %s20, 1
      %s2912 = scalar_select %p2911, %s20, 1
      %s2913 = smul.addr %s2912, 8
      %s2914 = scalar_lea.vmem %s9, %s2913
      // Predicated region
      $region57: #{_lambda_.1} parent=55 // pred_check
        %p2915 = pneg %p232
      $region58: #{_lambda_.1} parent=55 // pred_check_branch
        %2917 = sbr.rel (%p2915) target = $region60
      $region59: #{_lambda_.1} parent=55 // pred_region
        _
      $region60: #{_lambda_.1} parent=55 // pred_fallthru
        _
    $region56: #{_lambda_.1} parent=5 // pred_fallthru
      _
    %p2918 = scmp.le.s32.totalorder 2, %s15
    // Predicated region
    $region61: #{_lambda_.1} parent=5 // pred_check
      %p2919 = pneg %p2918
    $region62: #{_lambda_.1} parent=5 // pred_check_branch
      %2921 = sbr.rel (%p2919) target = $region64
    $region63: #{_lambda_.1} parent=5 // pred_region
      %s2922 = ssub.s32 %s15, 2
      // Predicated region
      $region65: #{_lambda_.1} parent=63 // pred_check
        %p2923 = pneg %p238
      $region66: #{_lambda_.1} parent=63 // pred_check_branch
        %2925 = sbr.rel (%p2923) target = $region68
      $region67: #{_lambda_.1} parent=63 // pred_region
        %p2926 = scmp.lt.s32.totalorder %s21, 1
        %s2927 = scalar_select %p2926, %s21, 1
        %s2928 = smul.addr %s2927, 8
        %s2929 = scalar_lea.vmem %s9, %s2928
      $region68: #{_lambda_.1} parent=63 // pred_fallthru
        _
    $region64: #{_lambda_.1} parent=5 // pred_fallthru
      _
  $region6: #{_lambda_.1} parent=0 // loop_footer
    %s19 = sadd.s32 1, %s15
  $region7: #{_lambda_.1} parent=0 // loop_footer_branch
    %14 = sbr.rel target = $region3
  $region8: #{_lambda_.1} parent=0 // loop_exit
    _

</llo_original>
